<compile_context>
chip_gen: v6e
topology: v6e:2x2x1
jax: 0.10.0
libtpu: 0.0.40
codegen_flags: <defaults>
</compile_context>

<pallas_src>
import jax
import jax.numpy as jnp
from jax import lax
from jax.experimental import pallas as pl
from jax.experimental.pallas import tpu as pltpu

BN_EPS = 1e-5
COMPUTE_DTYPE = jnp.bfloat16   # MXU operand dtype (accumulation stays f32)
ACT_DTYPE = jnp.bfloat16       # activation dtype between layers (halves HBM traffic)

# Default tile sizes (clamped per-layer to the padded problem size). With
# double-buffered inputs the working set is
# (TM*TK + TK*TN)*2B*2buf + TM*TN*(4B acc + 2B out) ~= 1.4 MiB -> comfortably
# inside v7x's 64 MiB VMEM (and the 32 MiB scoped default).
TILE_M = 256
TILE_N = 256   # lane-dense: >= 128 on every generation
TILE_K = 512


def _round_up(x, m):
    return (x + m - 1) // m * m


def _mish(x):
    # x * tanh(softplus(x)). The clamp at 20 matches torch.F.softplus's
    # threshold; tanh(20) == 1.0 in f32 so no jnp.where branch is needed and
    # exp / log1p / tanh all land on the EUP slot.
    return x * jnp.tanh(jnp.log1p(jnp.exp(jnp.minimum(x, 20.0))))


# ----------------------------- Pallas kernel -------------------------------- #

def _make_mm_bn_mish_kernel(n_in, has_res):
    """Tiled (multi-)matmul + folded-BN + Mish (+ residual) kernel.

    Ref order: x_0..x_{n-1}, w_0..w_{n-1}, scale, bias, [residual], out, acc.
    Grid: (M/TM, N/TN, K/TK); K is the reduction axis (last, "arbitrary").
    """

    def kernel(*refs):
        x_refs = refs[0:n_in]
        w_refs = refs[n_in:2 * n_in]
        s_ref = refs[2 * n_in]
        b_ref = refs[2 * n_in + 1]
        r_ref = refs[2 * n_in + 2] if has_res else None
        o_ref = refs[-2]
        acc_ref = refs[-1]

        @pl.when(pl.program_id(2) == 0)
        def _init():
            acc_ref[...] = jnp.zeros_like(acc_ref)

        acc = acc_ref[...]
        for x_ref, w_ref in zip(x_refs, w_refs):
            acc = acc + jnp.dot(x_ref[...], w_ref[...],
                                preferred_element_type=jnp.float32)
        acc_ref[...] = acc

        # BN fold + Mish (+ residual) only on the final K step.
        @pl.when(pl.program_id(2) == pl.num_programs(2) - 1)
        def _finalize():
            y = acc_ref[...] * s_ref[...] + b_ref[...]
            y = _mish(y)
            if has_res:
                y = y + r_ref[...].astype(jnp.float32)
            o_ref[...] = y.astype(o_ref.dtype)

    return kernel


def _fused_matmul_bn_mish(lhs_list, w_list, scale, bias, residual=None,
                          out_dtype=ACT_DTYPE):
    """out = mish((sum_i lhs_i @ w_i) * scale + bias) [+ residual], tiled on MXU.

    All lhs_i share (M, K) and all w_i share (K, N), so the fused dots ride a
    single (M/TM, N/TN, K/TK) grid with one f32 accumulator.
    """
    n_in = len(lhs_list)
    M, K = lhs_list[0].shape
    N = w_list[0].shape[1]
    for l in lhs_list:
        assert l.shape == (M, K)
    for w in w_list:
        assert w.shape == (K, N)

    tm = min(TILE_M, _round_up(M, 8))
    tn = min(TILE_N, _round_up(N, 128))
    tk = min(TILE_K, _round_up(K, 128))
    m_pad, n_pad, k_pad = _round_up(M, tm), _round_up(N, tn), _round_up(K, tk)

    lhs_p = [jnp.pad(l, ((0, m_pad - M), (0, k_pad - K))).astype(COMPUTE_DTYPE)
             for l in lhs_list]
    w_p = [jnp.pad(w, ((0, k_pad - K), (0, n_pad - N))).astype(COMPUTE_DTYPE)
           for w in w_list]
    s_p = jnp.pad(scale.reshape(1, N).astype(jnp.float32),
                  ((0, 0), (0, n_pad - N)))
    b_p = jnp.pad(bias.reshape(1, N).astype(jnp.float32),
                  ((0, 0), (0, n_pad - N)))

    args = lhs_p + w_p + [s_p, b_p]
    in_specs = (
        [pl.BlockSpec((tm, tk), lambda i, j, k: (i, k))] * n_in
        + [pl.BlockSpec((tk, tn), lambda i, j, k: (k, j))] * n_in
        + [pl.BlockSpec((1, tn), lambda i, j, k: (0, j))] * 2
    )
    if residual is not None:
        args.append(jnp.pad(residual.astype(ACT_DTYPE),
                            ((0, m_pad - M), (0, n_pad - N))))
        in_specs.append(pl.BlockSpec((tm, tn), lambda i, j, k: (i, j)))

    out = pl.pallas_call(
        _make_mm_bn_mish_kernel(n_in, residual is not None),
        out_shape=jax.ShapeDtypeStruct((m_pad, n_pad), out_dtype),
        grid=(m_pad // tm, n_pad // tn, k_pad // tk),
        in_specs=in_specs,
        out_specs=pl.BlockSpec((tm, tn), lambda i, j, k: (i, j)),
        scratch_shapes=[pltpu.VMEM((tm, tn), jnp.float32)],
        compiler_params=pltpu.CompilerParams(
            dimension_semantics=("parallel", "parallel", "arbitrary")),
    )(*args)
    return out[:M, :N]


# -------------------------------- JAX glue ---------------------------------- #

def _fold_bn(gamma, beta, mean, var):
    scale = gamma / jnp.sqrt(var + BN_EPS)
    return scale, beta - mean * scale


def _im2col(x, k, stride):
    """x: (N,H,W,C) -> patches (N*Ho*Wo, k*k*C); padding = k // 2 (PyTorch)."""
    N, H, W, C = x.shape
    pad = k // 2
    xp = jnp.pad(x, ((0, 0), (pad, pad), (pad, pad), (0, 0)))
    Ho = (H + 2 * pad - k) // stride + 1
    Wo = (W + 2 * pad - k) // stride + 1
    cols = []
    for ky in range(k):
        for kx in range(k):
            sl = lax.slice(
                xp,
                (0, ky, kx, 0),
                (N, ky + stride * (Ho - 1) + 1, kx + stride * (Wo - 1) + 1, C),
                (1, stride, stride, 1),
            )
            cols.append(sl)
    # (ky, kx, c) ordering == HWIO weight .reshape(k*k*C, Cout) row order.
    patches = jnp.concatenate(cols, axis=-1)
    return patches.reshape(N * Ho * Wo, k * k * C), (N, Ho, Wo)


def conv_bn_mish(x, w, gamma, beta, mean, var, stride=1, residual=None):
    """Convolutional(filters_in, filters_out, k, stride) + BN(eval) + Mish."""
    k, _, cin, cout = w.shape
    scale, bias = _fold_bn(gamma, beta, mean, var)
    if k == 1 and stride == 1:
        N, H, W_, _ = x.shape
        Ho, Wo = H, W_
        lhs = x.reshape(N * H * W_, cin)
    else:
        # TODO(synk): move 3x3 patch extraction into the kernel (halo-tile DMA
        # + k*k shifted dots) to avoid the k*k im2col inflation in HBM; here
        # only the K axis is tiled so patches never live whole in VMEM.
        lhs, (N, Ho, Wo) = _im2col(x, k, stride)
    res = residual.reshape(N * Ho * Wo, cout) if residual is not None else None
    out = _fused_matmul_bn_mish([lhs], [w.reshape(k * k * cin, cout)],
                                scale, bias, residual=res)
    return out.reshape(N, Ho, Wo, cout)


def conv1x1_pair_bn_mish(x, layer_a, layer_b):
    """Two 1x1 Conv+BN+Mish layers sharing one input, fused into one matmul
    with concatenated output channels (wider, lane-dense output)."""
    wa, ga, ba, ma, va = layer_a
    wb, gb, bb, mb, vb = layer_b
    cin, ca = wa.shape[2], wa.shape[3]
    cb = wb.shape[3]
    N, H, W_, _ = x.shape
    lhs = x.reshape(N * H * W_, cin)
    w_cat = jnp.concatenate([wa.reshape(cin, ca), wb.reshape(cin, cb)], axis=1)
    sa, oa = _fold_bn(ga, ba, ma, va)
    sb, ob = _fold_bn(gb, bb, mb, vb)
    out = _fused_matmul_bn_mish([lhs], [w_cat],
                                jnp.concatenate([sa, sb]),
                                jnp.concatenate([oa, ob]))
    out = out.reshape(N, H, W_, ca + cb)
    return out[..., :ca], out[..., ca:]


def concat_conv1x1_bn_mish(xa, xb, w, gamma, beta, mean, var):
    """Conv1x1 + BN + Mish over channel-concat [xa, xb] without materializing
    the concatenation: out = mish((xa @ W[:ca] + xb @ W[ca:]) * s + b)."""
    N, H, W_, ca = xa.shape
    cb = xb.shape[-1]
    cout = w.shape[-1]
    assert ca == cb
    wm = w.reshape(ca + cb, cout)
    scale, bias = _fold_bn(gamma, beta, mean, var)
    out = _fused_matmul_bn_mish(
        [xa.reshape(N * H * W_, ca), xb.reshape(N * H * W_, cb)],
        [wm[:ca], wm[ca:]], scale, bias)
    return out.reshape(N, H, W_, cout)


# --------------------------- parameter creation ------------------------------ #

def _make_layer(key, k, cin, cout):
    w = 0.1 * jax.random.normal(key, (k, k, cin, cout), dtype=jnp.float32)
    gamma = 1.0 + 0.05 * jnp.arange(cout, dtype=jnp.float32) / cout
    beta = 0.02 * jnp.arange(cout, dtype=jnp.float32)
    mean = jnp.zeros((cout,), jnp.float32)
    var = jnp.ones((cout,), jnp.float32)
    return (w, gamma, beta, mean, var)


def init_params(key, in_ch, out_ch):
    ks = jax.random.split(key, 7)
    return {
        "down":    _make_layer(ks[0], 3, in_ch, out_ch),       # downsample, stride 2
        "split0":  _make_layer(ks[1], 1, out_ch, out_ch),      # split_conv0
        "split1":  _make_layer(ks[2], 1, out_ch, out_ch),      # split_conv1
        "blk1":    _make_layer(ks[3], 1, out_ch, in_ch),       # CSPBlock 1x1 (hidden=in_ch)
        "blk2":    _make_layer(ks[4], 3, in_ch, out_ch),       # CSPBlock 3x3
        "blk_out": _make_layer(ks[5], 1, out_ch, out_ch),      # blocks_conv final 1x1
        "concat":  _make_layer(ks[6], 1, 2 * out_ch, out_ch),  # concat_conv
    }


# ------------------------------ forward pass --------------------------------- #

def csp_first_stage(x_nhwc, p):
    d = conv_bn_mish(x_nhwc, *p["down"], stride=2)               # 3x3, stride 2
    x0, x1 = conv1x1_pair_bn_mish(d, p["split0"], p["split1"])   # fused split convs
    b = conv_bn_mish(x1, *p["blk1"])                             # CSPBlock 1x1
    b = conv_bn_mish(b, *p["blk2"], residual=x1)                 # CSPBlock 3x3 + residual
    b = conv_bn_mish(b, *p["blk_out"])                           # blocks_conv final 1x1
    return concat_conv1x1_bn_mish(b, x0, *p["concat"])           # cat([x1, x0]) + 1x1, fused


# ---------------------------- pure-JAX reference ------------------------------ #

def _ref_layer(x, w, gamma, beta, mean, var, stride=1):
    # Mirrors the kernel numerics: bf16 conv operands, f32 accumulation,
    # f32 BN fold + Mish epilogue.
    k = w.shape[0]
    y = lax.conv_general_dilated(
        x.astype(COMPUTE_DTYPE), w.astype(COMPUTE_DTYPE),
        (stride, stride), [(k // 2, k // 2)] * 2,
        dimension_numbers=("NHWC", "HWIO", "NHWC"),
        preferred_element_type=jnp.float32)
    scale, bias = _fold_bn(gamma, beta, mean, var)
    return _mish(y * scale + bias)


def ref_csp_first_stage(x_nhwc, p):
    d = _ref_layer(x_nhwc, *p["down"], stride=2)
    x0 = _ref_layer(d, *p["split0"])
    x1 = _ref_layer(d, *p["split1"])
    b = _ref_layer(x1, *p["blk1"])
    b = _ref_layer(b, *p["blk2"]) + x1
    b = _ref_layer(b, *p["blk_out"])
    cat = jnp.concatenate([b, x0], axis=-1)
    return _ref_layer(cat, *p["concat"])


# ----------------------------------- main ------------------------------------ #

if __name__ == "__main__":
    key = jax.random.PRNGKey(0)
    k_x, k_p = jax.random.split(key)

    B, IN_CH, OUT_CH, H, W = 2, 4, 8, 16, 16
    x_nchw = jax.random.normal(k_x, (B, IN_CH, H, W), dtype=jnp.float32)
    x_nhwc = jnp.transpose(x_nchw, (0, 2, 3, 1))   # NCHW -> NHWC at the boundary

    params = init_params(k_p, IN_CH, OUT_CH)

    out = jax.block_until_ready(jax.jit(csp_first_stage)(x_nhwc, params))
    assert out.shape == (B, H // 2, W // 2, OUT_CH), out.shape

    ref = jax.block_until_ready(jax.jit(ref_csp_first_stage)(x_nhwc, params))
    out_f32 = out.astype(jnp.float32)
    max_err = float(jnp.max(jnp.abs(out_f32 - ref)))
    assert jnp.allclose(out_f32, ref, atol=2e-2, rtol=2e-2), max_err

    print("KERNEL_OK")
</pallas_src>

<mosaic_0001>
module attributes {stable_mosaic.version = 11 : i64} {
  func.func @kernel(%arg0: i32, %arg1: i32, %arg2: i32, %arg3: memref<128x128xbf16, #tpu.memory_space<vmem>>, %arg4: memref<128x128xbf16, #tpu.memory_space<vmem>>, %arg5: memref<1x128xf32, #tpu.memory_space<vmem>>, %arg6: memref<1x128xf32, #tpu.memory_space<vmem>>, %arg7: memref<128x128xbf16, #tpu.memory_space<vmem>>, %arg8: memref<128x128xf32, #tpu.memory_space<vmem>>) attributes {dimension_semantics = [#tpu.dimension_semantics<parallel>, #tpu.dimension_semantics<parallel>, #tpu.dimension_semantics<arbitrary>], iteration_bounds = array<i64: 1, 1, 1>, scalar_prefetch = 0 : i64, scratch_operands = 1 : i64, tpu.core_type = #tpu.core_type<tc>, window_params = [{transform_indices = @transform_0, window_bounds = array<i64: 128, 128>}, {transform_indices = @transform_1, window_bounds = array<i64: 128, 128>}, {transform_indices = @transform_2, window_bounds = array<i64: 1, 128>}, {transform_indices = @transform_3, window_bounds = array<i64: 1, 128>}, {transform_indices = @transform_4, window_bounds = array<i64: 128, 128>}]} {
    %c0_i32 = arith.constant 0 : i32
    %0 = arith.cmpi eq, %arg2, %c0_i32 : i32
    %1 = arith.extui %0 : i1 to i32
    %c0_i32_0 = arith.constant 0 : i32
    %2 = arith.cmpi ne, %1, %c0_i32_0 : i32
    scf.if %2 {
      %cst_10 = arith.constant 0.000000e+00 : f32
      %12 = vector.broadcast %cst_10 : f32 to vector<128x128xf32>
      %c0_11 = arith.constant 0 : index
      %c0_12 = arith.constant 0 : index
      %13 = vector.load %arg8[%c0_11, %c0_12] : memref<128x128xf32, #tpu.memory_space<vmem>>, vector<128x128xf32>
      tpu.vector_store %arg8[%c0_11, %c0_12], %12 {strides = array<i32>} : memref<128x128xf32, #tpu.memory_space<vmem>>, vector<128x128xf32>,
    } else {
    }
    %c0 = arith.constant 0 : index
    %c0_1 = arith.constant 0 : index
    %3 = vector.load %arg8[%c0, %c0_1] : memref<128x128xf32, #tpu.memory_space<vmem>>, vector<128x128xf32>
    %c0_2 = arith.constant 0 : index
    %c0_3 = arith.constant 0 : index
    %4 = vector.load %arg3[%c0_2, %c0_3] : memref<128x128xbf16, #tpu.memory_space<vmem>>, vector<128x128xbf16>
    %c0_4 = arith.constant 0 : index
    %c0_5 = arith.constant 0 : index
    %5 = vector.load %arg4[%c0_4, %c0_5] : memref<128x128xbf16, #tpu.memory_space<vmem>>, vector<128x128xbf16>
    %cst = arith.constant dense<0.000000e+00> : vector<128x128xf32>
    %6 = tpu.matmul %4, %5, %cst {dimension_numbers = #tpu.dot_dimension_numbers<[1], [0], [0], [1], [0, 0, 1, 1], [], []>} : vector<128x128xbf16>, vector<128x128xbf16>, vector<128x128xf32> -> vector<128x128xf32>
    %7 = arith.addf %3, %6 : vector<128x128xf32>
    %c0_6 = arith.constant 0 : index
    %c0_7 = arith.constant 0 : index
    %8 = vector.load %arg8[%c0_6, %c0_7] : memref<128x128xf32, #tpu.memory_space<vmem>>, vector<128x128xf32>
    tpu.vector_store %arg8[%c0_6, %c0_7], %7 {strides = array<i32>} : memref<128x128xf32, #tpu.memory_space<vmem>>, vector<128x128xf32>,
    %c0_i32_8 = arith.constant 0 : i32
    %9 = arith.cmpi eq, %arg2, %c0_i32_8 : i32
    %10 = arith.extui %9 : i1 to i32
    %c0_i32_9 = arith.constant 0 : i32
    %11 = arith.cmpi ne, %10, %c0_i32_9 : i32
    scf.if %11 {
      %c0_10 = arith.constant 0 : index
      %c0_11 = arith.constant 0 : index
      %12 = vector.load %arg8[%c0_10, %c0_11] : memref<128x128xf32, #tpu.memory_space<vmem>>, vector<128x128xf32>
      %c0_12 = arith.constant 0 : index
      %c0_13 = arith.constant 0 : index
      %13 = vector.load %arg5[%c0_12, %c0_13] : memref<1x128xf32, #tpu.memory_space<vmem>>, vector<1x128xf32>
      %14 = vector.broadcast %13 : vector<1x128xf32> to vector<128x128xf32>
      %15 = arith.mulf %12, %14 : vector<128x128xf32>
      %c0_14 = arith.constant 0 : index
      %c0_15 = arith.constant 0 : index
      %16 = vector.load %arg6[%c0_14, %c0_15] : memref<1x128xf32, #tpu.memory_space<vmem>>, vector<1x128xf32>
      %17 = vector.broadcast %16 : vector<1x128xf32> to vector<128x128xf32>
      %18 = arith.addf %15, %17 : vector<128x128xf32>
      %cst_16 = arith.constant 2.000000e+01 : f32
      %19 = vector.broadcast %cst_16 : f32 to vector<128x128xf32>
      %20 = arith.minimumf %18, %19 : vector<128x128xf32>
      %21 = math.exp %20 : vector<128x128xf32>
      %22 = math.log1p %21 : vector<128x128xf32>
      %23 = math.tanh %22 : vector<128x128xf32>
      %24 = arith.mulf %18, %23 : vector<128x128xf32>
      %25 = arith.truncf %24 : vector<128x128xf32> to vector<128x128xbf16>
      %c0_17 = arith.constant 0 : index
      %c0_18 = arith.constant 0 : index
      %26 = vector.load %arg7[%c0_17, %c0_18] : memref<128x128xbf16, #tpu.memory_space<vmem>>, vector<128x128xbf16>
      tpu.vector_store %arg7[%c0_17, %c0_18], %25 {strides = array<i32>} : memref<128x128xbf16, #tpu.memory_space<vmem>>, vector<128x128xbf16>,
    } else {
    }
    return
  }
  func.func @transform_0(%arg0: i32, %arg1: i32, %arg2: i32) -> (i32, i32) {
    %c0_i32 = arith.constant 0 : i32
    return %arg0, %arg2 : i32, i32
  }
  func.func @transform_1(%arg0: i32, %arg1: i32, %arg2: i32) -> (i32, i32) {
    %c0_i32 = arith.constant 0 : i32
    return %arg2, %arg1 : i32, i32
  }
  func.func @transform_2(%arg0: i32, %arg1: i32, %arg2: i32) -> (i32, i32) {
    %c0_i32 = arith.constant 0 : i32
    %c0_i32_0 = arith.constant 0 : i32
    return %c0_i32, %arg1 : i32, i32
  }
  func.func @transform_3(%arg0: i32, %arg1: i32, %arg2: i32) -> (i32, i32) {
    %c0_i32 = arith.constant 0 : i32
    %c0_i32_0 = arith.constant 0 : i32
    return %c0_i32, %arg1 : i32, i32
  }
  func.func @transform_4(%arg0: i32, %arg1: i32, %arg2: i32) -> (i32, i32) {
    %c0_i32 = arith.constant 0 : i32
    return %arg0, %arg1 : i32, i32
  }
}

module attributes {stable_mosaic.version = 11 : i64} {
  func.func @kernel(%arg0: i32, %arg1: i32, %arg2: i32, %arg3: memref<128x128xbf16, #tpu.memory_space<vmem>>, %arg4: memref<128x128xbf16, #tpu.memory_space<vmem>>, %arg5: memref<1x128xf32, #tpu.memory_space<vmem>>, %arg6: memref<1x128xf32, #tpu.memory_space<vmem>>, %arg7: memref<128x128xbf16, #tpu.memory_space<vmem>>, %arg8: memref<128x128xbf16, #tpu.memory_space<vmem>>, %arg9: memref<128x128xf32, #tpu.memory_space<vmem>>) attributes {dimension_semantics = [#tpu.dimension_semantics<parallel>, #tpu.dimension_semantics<parallel>, #tpu.dimension_semantics<arbitrary>], iteration_bounds = array<i64: 1, 1, 1>, scalar_prefetch = 0 : i64, scratch_operands = 1 : i64, tpu.core_type = #tpu.core_type<tc>, window_params = [{transform_indices = @transform_0, window_bounds = array<i64: 128, 128>}, {transform_indices = @transform_1, window_bounds = array<i64: 128, 128>}, {transform_indices = @transform_2, window_bounds = array<i64: 1, 128>}, {transform_indices = @transform_3, window_bounds = array<i64: 1, 128>}, {transform_indices = @transform_4, window_bounds = array<i64: 128, 128>}, {transform_indices = @transform_5, window_bounds = array<i64: 128, 128>}]} {
    %c0_i32 = arith.constant 0 : i32
    %0 = arith.cmpi eq, %arg2, %c0_i32 : i32
    %1 = arith.extui %0 : i1 to i32
    %c0_i32_0 = arith.constant 0 : i32
    %2 = arith.cmpi ne, %1, %c0_i32_0 : i32
    scf.if %2 {
      %cst_10 = arith.constant 0.000000e+00 : f32
      %12 = vector.broadcast %cst_10 : f32 to vector<128x128xf32>
      %c0_11 = arith.constant 0 : index
      %c0_12 = arith.constant 0 : index
      %13 = vector.load %arg9[%c0_11, %c0_12] : memref<128x128xf32, #tpu.memory_space<vmem>>, vector<128x128xf32>
      tpu.vector_store %arg9[%c0_11, %c0_12], %12 {strides = array<i32>} : memref<128x128xf32, #tpu.memory_space<vmem>>, vector<128x128xf32>,
    } else {
    }
    %c0 = arith.constant 0 : index
    %c0_1 = arith.constant 0 : index
    %3 = vector.load %arg9[%c0, %c0_1] : memref<128x128xf32, #tpu.memory_space<vmem>>, vector<128x128xf32>
    %c0_2 = arith.constant 0 : index
    %c0_3 = arith.constant 0 : index
    %4 = vector.load %arg3[%c0_2, %c0_3] : memref<128x128xbf16, #tpu.memory_space<vmem>>, vector<128x128xbf16>
    %c0_4 = arith.constant 0 : index
    %c0_5 = arith.constant 0 : index
    %5 = vector.load %arg4[%c0_4, %c0_5] : memref<128x128xbf16, #tpu.memory_space<vmem>>, vector<128x128xbf16>
    %cst = arith.constant dense<0.000000e+00> : vector<128x128xf32>
    %6 = tpu.matmul %4, %5, %cst {dimension_numbers = #tpu.dot_dimension_numbers<[1], [0], [0], [1], [0, 0, 1, 1], [], []>} : vector<128x128xbf16>, vector<128x128xbf16>, vector<128x128xf32> -> vector<128x128xf32>
    %7 = arith.addf %3, %6 : vector<128x128xf32>
    %c0_6 = arith.constant 0 : index
    %c0_7 = arith.constant 0 : index
    %8 = vector.load %arg9[%c0_6, %c0_7] : memref<128x128xf32, #tpu.memory_space<vmem>>, vector<128x128xf32>
    tpu.vector_store %arg9[%c0_6, %c0_7], %7 {strides = array<i32>} : memref<128x128xf32, #tpu.memory_space<vmem>>, vector<128x128xf32>,
    %c0_i32_8 = arith.constant 0 : i32
    %9 = arith.cmpi eq, %arg2, %c0_i32_8 : i32
    %10 = arith.extui %9 : i1 to i32
    %c0_i32_9 = arith.constant 0 : i32
    %11 = arith.cmpi ne, %10, %c0_i32_9 : i32
    scf.if %11 {
      %c0_10 = arith.constant 0 : index
      %c0_11 = arith.constant 0 : index
      %12 = vector.load %arg9[%c0_10, %c0_11] : memref<128x128xf32, #tpu.memory_space<vmem>>, vector<128x128xf32>
      %c0_12 = arith.constant 0 : index
      %c0_13 = arith.constant 0 : index
      %13 = vector.load %arg5[%c0_12, %c0_13] : memref<1x128xf32, #tpu.memory_space<vmem>>, vector<1x128xf32>
      %14 = vector.broadcast %13 : vector<1x128xf32> to vector<128x128xf32>
      %15 = arith.mulf %12, %14 : vector<128x128xf32>
      %c0_14 = arith.constant 0 : index
      %c0_15 = arith.constant 0 : index
      %16 = vector.load %arg6[%c0_14, %c0_15] : memref<1x128xf32, #tpu.memory_space<vmem>>, vector<1x128xf32>
      %17 = vector.broadcast %16 : vector<1x128xf32> to vector<128x128xf32>
      %18 = arith.addf %15, %17 : vector<128x128xf32>
      %cst_16 = arith.constant 2.000000e+01 : f32
      %19 = vector.broadcast %cst_16 : f32 to vector<128x128xf32>
      %20 = arith.minimumf %18, %19 : vector<128x128xf32>
      %21 = math.exp %20 : vector<128x128xf32>
      %22 = math.log1p %21 : vector<128x128xf32>
      %23 = math.tanh %22 : vector<128x128xf32>
      %24 = arith.mulf %18, %23 : vector<128x128xf32>
      %c0_17 = arith.constant 0 : index
      %c0_18 = arith.constant 0 : index
      %25 = vector.load %arg7[%c0_17, %c0_18] : memref<128x128xbf16, #tpu.memory_space<vmem>>, vector<128x128xbf16>
      %26 = arith.extf %25 : vector<128x128xbf16> to vector<128x128xf32>
      %27 = arith.addf %24, %26 : vector<128x128xf32>
      %28 = arith.truncf %27 : vector<128x128xf32> to vector<128x128xbf16>
      %c0_19 = arith.constant 0 : index
      %c0_20 = arith.constant 0 : index
      %29 = vector.load %arg8[%c0_19, %c0_20] : memref<128x128xbf16, #tpu.memory_space<vmem>>, vector<128x128xbf16>
      tpu.vector_store %arg8[%c0_19, %c0_20], %28 {strides = array<i32>} : memref<128x128xbf16, #tpu.memory_space<vmem>>, vector<128x128xbf16>,
    } else {
    }
    return
  }
  func.func @transform_0(%arg0: i32, %arg1: i32, %arg2: i32) -> (i32, i32) {
    %c0_i32 = arith.constant 0 : i32
    return %arg0, %arg2 : i32, i32
  }
  func.func @transform_1(%arg0: i32, %arg1: i32, %arg2: i32) -> (i32, i32) {
    %c0_i32 = arith.constant 0 : i32
    return %arg2, %arg1 : i32, i32
  }
  func.func @transform_2(%arg0: i32, %arg1: i32, %arg2: i32) -> (i32, i32) {
    %c0_i32 = arith.constant 0 : i32
    %c0_i32_0 = arith.constant 0 : i32
    return %c0_i32, %arg1 : i32, i32
  }
  func.func @transform_3(%arg0: i32, %arg1: i32, %arg2: i32) -> (i32, i32) {
    %c0_i32 = arith.constant 0 : i32
    %c0_i32_0 = arith.constant 0 : i32
    return %c0_i32, %arg1 : i32, i32
  }
  func.func @transform_4(%arg0: i32, %arg1: i32, %arg2: i32) -> (i32, i32) {
    %c0_i32 = arith.constant 0 : i32
    return %arg0, %arg1 : i32, i32
  }
  func.func @transform_5(%arg0: i32, %arg1: i32, %arg2: i32) -> (i32, i32) {
    %c0_i32 = arith.constant 0 : i32
    return %arg0, %arg1 : i32, i32
  }
}

module attributes {stable_mosaic.version = 11 : i64} {
  func.func @kernel(%arg0: i32, %arg1: i32, %arg2: i32, %arg3: memref<128x128xbf16, #tpu.memory_space<vmem>>, %arg4: memref<128x128xbf16, #tpu.memory_space<vmem>>, %arg5: memref<128x128xbf16, #tpu.memory_space<vmem>>, %arg6: memref<128x128xbf16, #tpu.memory_space<vmem>>, %arg7: memref<1x128xf32, #tpu.memory_space<vmem>>, %arg8: memref<1x128xf32, #tpu.memory_space<vmem>>, %arg9: memref<128x128xbf16, #tpu.memory_space<vmem>>, %arg10: memref<128x128xf32, #tpu.memory_space<vmem>>) attributes {dimension_semantics = [#tpu.dimension_semantics<parallel>, #tpu.dimension_semantics<parallel>, #tpu.dimension_semantics<arbitrary>], iteration_bounds = array<i64: 1, 1, 1>, scalar_prefetch = 0 : i64, scratch_operands = 1 : i64, tpu.core_type = #tpu.core_type<tc>, window_params = [{transform_indices = @transform_0, window_bounds = array<i64: 128, 128>}, {transform_indices = @transform_1, window_bounds = array<i64: 128, 128>}, {transform_indices = @transform_2, window_bounds = array<i64: 128, 128>}, {transform_indices = @transform_3, window_bounds = array<i64: 128, 128>}, {transform_indices = @transform_4, window_bounds = array<i64: 1, 128>}, {transform_indices = @transform_5, window_bounds = array<i64: 1, 128>}, {transform_indices = @transform_6, window_bounds = array<i64: 128, 128>}]} {
    %c0_i32 = arith.constant 0 : i32
    %0 = arith.cmpi eq, %arg2, %c0_i32 : i32
    %1 = arith.extui %0 : i1 to i32
    %c0_i32_0 = arith.constant 0 : i32
    %2 = arith.cmpi ne, %1, %c0_i32_0 : i32
    scf.if %2 {
      %cst_15 = arith.constant 0.000000e+00 : f32
      %16 = vector.broadcast %cst_15 : f32 to vector<128x128xf32>
      %c0_16 = arith.constant 0 : index
      %c0_17 = arith.constant 0 : index
      %17 = vector.load %arg10[%c0_16, %c0_17] : memref<128x128xf32, #tpu.memory_space<vmem>>, vector<128x128xf32>
      tpu.vector_store %arg10[%c0_16, %c0_17], %16 {strides = array<i32>} : memref<128x128xf32, #tpu.memory_space<vmem>>, vector<128x128xf32>,
    } else {
    }
    %c0 = arith.constant 0 : index
    %c0_1 = arith.constant 0 : index
    %3 = vector.load %arg10[%c0, %c0_1] : memref<128x128xf32, #tpu.memory_space<vmem>>, vector<128x128xf32>
    %c0_2 = arith.constant 0 : index
    %c0_3 = arith.constant 0 : index
    %4 = vector.load %arg3[%c0_2, %c0_3] : memref<128x128xbf16, #tpu.memory_space<vmem>>, vector<128x128xbf16>
    %c0_4 = arith.constant 0 : index
    %c0_5 = arith.constant 0 : index
    %5 = vector.load %arg5[%c0_4, %c0_5] : memref<128x128xbf16, #tpu.memory_space<vmem>>, vector<128x128xbf16>
    %cst = arith.constant dense<0.000000e+00> : vector<128x128xf32>
    %6 = tpu.matmul %4, %5, %cst {dimension_numbers = #tpu.dot_dimension_numbers<[1], [0], [0], [1], [0, 0, 1, 1], [], []>} : vector<128x128xbf16>, vector<128x128xbf16>, vector<128x128xf32> -> vector<128x128xf32>
    %7 = arith.addf %3, %6 : vector<128x128xf32>
    %c0_6 = arith.constant 0 : index
    %c0_7 = arith.constant 0 : index
    %8 = vector.load %arg4[%c0_6, %c0_7] : memref<128x128xbf16, #tpu.memory_space<vmem>>, vector<128x128xbf16>
    %c0_8 = arith.constant 0 : index
    %c0_9 = arith.constant 0 : index
    %9 = vector.load %arg6[%c0_8, %c0_9] : memref<128x128xbf16, #tpu.memory_space<vmem>>, vector<128x128xbf16>
    %cst_10 = arith.constant dense<0.000000e+00> : vector<128x128xf32>
    %10 = tpu.matmul %8, %9, %cst_10 {dimension_numbers = #tpu.dot_dimension_numbers<[1], [0], [0], [1], [0, 0, 1, 1], [], []>} : vector<128x128xbf16>, vector<128x128xbf16>, vector<128x128xf32> -> vector<128x128xf32>
    %11 = arith.addf %7, %10 : vector<128x128xf32>
    %c0_11 = arith.constant 0 : index
    %c0_12 = arith.constant 0 : index
    %12 = vector.load %arg10[%c0_11, %c0_12] : memref<128x128xf32, #tpu.memory_space<vmem>>, vector<128x128xf32>
    tpu.vector_store %arg10[%c0_11, %c0_12], %11 {strides = array<i32>} : memref<128x128xf32, #tpu.memory_space<vmem>>, vector<128x128xf32>,
    %c0_i32_13 = arith.constant 0 : i32
    %13 = arith.cmpi eq, %arg2, %c0_i32_13 : i32
    %14 = arith.extui %13 : i1 to i32
    %c0_i32_14 = arith.constant 0 : i32
    %15 = arith.cmpi ne, %14, %c0_i32_14 : i32
    scf.if %15 {
      %c0_15 = arith.constant 0 : index
      %c0_16 = arith.constant 0 : index
      %16 = vector.load %arg10[%c0_15, %c0_16] : memref<128x128xf32, #tpu.memory_space<vmem>>, vector<128x128xf32>
      %c0_17 = arith.constant 0 : index
      %c0_18 = arith.constant 0 : index
      %17 = vector.load %arg7[%c0_17, %c0_18] : memref<1x128xf32, #tpu.memory_space<vmem>>, vector<1x128xf32>
      %18 = vector.broadcast %17 : vector<1x128xf32> to vector<128x128xf32>
      %19 = arith.mulf %16, %18 : vector<128x128xf32>
      %c0_19 = arith.constant 0 : index
      %c0_20 = arith.constant 0 : index
      %20 = vector.load %arg8[%c0_19, %c0_20] : memref<1x128xf32, #tpu.memory_space<vmem>>, vector<1x128xf32>
      %21 = vector.broadcast %20 : vector<1x128xf32> to vector<128x128xf32>
      %22 = arith.addf %19, %21 : vector<128x128xf32>
      %cst_21 = arith.constant 2.000000e+01 : f32
      %23 = vector.broadcast %cst_21 : f32 to vector<128x128xf32>
      %24 = arith.minimumf %22, %23 : vector<128x128xf32>
      %25 = math.exp %24 : vector<128x128xf32>
      %26 = math.log1p %25 : vector<128x128xf32>
      %27 = math.tanh %26 : vector<128x128xf32>
      %28 = arith.mulf %22, %27 : vector<128x128xf32>
      %29 = arith.truncf %28 : vector<128x128xf32> to vector<128x128xbf16>
      %c0_22 = arith.constant 0 : index
      %c0_23 = arith.constant 0 : index
      %30 = vector.load %arg9[%c0_22, %c0_23] : memref<128x128xbf16, #tpu.memory_space<vmem>>, vector<128x128xbf16>
      tpu.vector_store %arg9[%c0_22, %c0_23], %29 {strides = array<i32>} : memref<128x128xbf16, #tpu.memory_space<vmem>>, vector<128x128xbf16>,
    } else {
    }
    return
  }
  func.func @transform_0(%arg0: i32, %arg1: i32, %arg2: i32) -> (i32, i32) {
    %c0_i32 = arith.constant 0 : i32
    return %arg0, %arg2 : i32, i32
  }
  func.func @transform_1(%arg0: i32, %arg1: i32, %arg2: i32) -> (i32, i32) {
    %c0_i32 = arith.constant 0 : i32
    return %arg0, %arg2 : i32, i32
  }
  func.func @transform_2(%arg0: i32, %arg1: i32, %arg2: i32) -> (i32, i32) {
    %c0_i32 = arith.constant 0 : i32
    return %arg2, %arg1 : i32, i32
  }
  func.func @transform_3(%arg0: i32, %arg1: i32, %arg2: i32) -> (i32, i32) {
    %c0_i32 = arith.constant 0 : i32
    return %arg2, %arg1 : i32, i32
  }
  func.func @transform_4(%arg0: i32, %arg1: i32, %arg2: i32) -> (i32, i32) {
    %c0_i32 = arith.constant 0 : i32
    %c0_i32_0 = arith.constant 0 : i32
    return %c0_i32, %arg1 : i32, i32
  }
  func.func @transform_5(%arg0: i32, %arg1: i32, %arg2: i32) -> (i32, i32) {
    %c0_i32 = arith.constant 0 : i32
    %c0_i32_0 = arith.constant 0 : i32
    return %c0_i32, %arg1 : i32, i32
  }
  func.func @transform_6(%arg0: i32, %arg1: i32, %arg2: i32) -> (i32, i32) {
    %c0_i32 = arith.constant 0 : i32
    return %arg0, %arg1 : i32, i32
  }
}

</mosaic_0001>

<llo_original>
// kernel: csp_first_stage.6
$region0: #{csp_first_stage.6}
  #allocation0 [shape = 'u32[]', space=smem, size = 0x4, offset = 0x4, fixed_abs, tag = 'smem constant byte address 0x4 - core index']
  #allocation1 [shape = 'u32[144,128]{1,0:T(1,128)}', space=vmem, size = 0x12000, scoped, tag = 'internal scratch']
  #allocation2 [shape = 'f32[128,128]{1,0:T(8,128)}', space=vmem, size = 0x10000, scoped, tag = 'scratch operand']
  %s0 = inlined_call_operand.vmem [shape: bf16[128,128], index: 0, kind: input, shape index: {}]
  %s1 = inlined_call_operand.vmem [shape: bf16[128,128], index: 1, kind: input, shape index: {}]
  %s2 = inlined_call_operand.vmem [shape: f32[1,128], index: 2, kind: input, shape index: {}]
  %s3 = inlined_call_operand.vmem [shape: f32[1,128], index: 3, kind: input, shape index: {}]
  %s4 = inlined_call_operand.vmem [shape: bf16[128,128], index: 4, kind: output, shape index: {}]
  %s5 = sld [smem:[#allocation0]]
  $region34: #{csp_first_stage.6} parent=0
    _
  %s7 = ssub.s32 1, %s5
  %s8 = scalar_select 0, %s7, %s5
  // Predicated region
  $region2: #{csp_first_stage.6} parent=0 // pred_check
    _
  $region3: #{csp_first_stage.6} parent=0 // pred_check_branch
    %10 = sbr.rel (0) target = $region5
  $region4: #{csp_first_stage.6} parent=0 // pred_region
    _
  $region5: #{csp_first_stage.6} parent=0 // pred_fallthru
    _
  // Predicated region
  $region6: #{csp_first_stage.6} parent=0 // pred_check
    _
  $region7: #{csp_first_stage.6} parent=0 // pred_check_branch
    %12 = sbr.rel (0) target = $region9
  $region8: #{csp_first_stage.6} parent=0 // pred_region
    _
  $region9: #{csp_first_stage.6} parent=0 // pred_fallthru
    _
  // Predicated region
  $region10: #{csp_first_stage.6} parent=0 // pred_check
    _
  $region11: #{csp_first_stage.6} parent=0 // pred_check_branch
    %14 = sbr.rel (0) target = $region13
  $region12: #{csp_first_stage.6} parent=0 // pred_region
    _
  $region13: #{csp_first_stage.6} parent=0 // pred_fallthru
    _
  // Predicated region
  $region14: #{csp_first_stage.6} parent=0 // pred_check
    _
  $region15: #{csp_first_stage.6} parent=0 // pred_check_branch
    %16 = sbr.rel (0) target = $region17
  $region16: #{csp_first_stage.6} parent=0 // pred_region
    _
  $region17: #{csp_first_stage.6} parent=0 // pred_fallthru
    _
  %p18 = scmp.eq.s32.totalorder 0, 0
  // Predicated region
  $region18: #{csp_first_stage.6} parent=0 // pred_check
    %p19 = pneg %p18
  $region19: #{csp_first_stage.6} parent=0 // pred_check_branch
    %21 = sbr.rel (%p19) target = $region21
  $region20: #{csp_first_stage.6} parent=0 // pred_region
    %22 = vst [vmem:[#allocation2] sm:$0xff] 0.0
    %23 = vst [vmem:[#allocation2 + $0x8] sm:$0xff] 0.0
    %24 = vst [vmem:[#allocation2 + $0x10] sm:$0xff] 0.0
    %25 = vst [vmem:[#allocation2 + $0x18] sm:$0xff] 0.0
    %26 = vst [vmem:[#allocation2 + $0x20] sm:$0xff] 0.0
    %27 = vst [vmem:[#allocation2 + $0x28] sm:$0xff] 0.0
    %28 = vst [vmem:[#allocation2 + $0x30] sm:$0xff] 0.0
    %29 = vst [vmem:[#allocation2 + $0x38] sm:$0xff] 0.0
    %30 = vst [vmem:[#allocation2 + $0x40] sm:$0xff] 0.0
    %31 = vst [vmem:[#allocation2 + $0x48] sm:$0xff] 0.0
    %32 = vst [vmem:[#allocation2 + $0x50] sm:$0xff] 0.0
    %33 = vst [vmem:[#allocation2 + $0x58] sm:$0xff] 0.0
    %34 = vst [vmem:[#allocation2 + $0x60] sm:$0xff] 0.0
    %35 = vst [vmem:[#allocation2 + $0x68] sm:$0xff] 0.0
    %36 = vst [vmem:[#allocation2 + $0x70] sm:$0xff] 0.0
    %37 = vst [vmem:[#allocation2 + $0x78] sm:$0xff] 0.0
  $region21: #{csp_first_stage.6} parent=0 // pred_fallthru
    _
  %v38 = vld [vmem:[#allocation2] sm:$0xff]
  %v39 = vld [vmem:[#allocation2 + $0x8] sm:$0xff]
  %v40 = vld [vmem:[#allocation2 + $0x10] sm:$0xff]
  %v41 = vld [vmem:[#allocation2 + $0x18] sm:$0xff]
  %v42 = vld [vmem:[#allocation2 + $0x20] sm:$0xff]
  %v43 = vld [vmem:[#allocation2 + $0x28] sm:$0xff]
  %v44 = vld [vmem:[#allocation2 + $0x30] sm:$0xff]
  %v45 = vld [vmem:[#allocation2 + $0x38] sm:$0xff]
  %v46 = vld [vmem:[#allocation2 + $0x40] sm:$0xff]
  %v47 = vld [vmem:[#allocation2 + $0x48] sm:$0xff]
  %v48 = vld [vmem:[#allocation2 + $0x50] sm:$0xff]
  %v49 = vld [vmem:[#allocation2 + $0x58] sm:$0xff]
  %v50 = vld [vmem:[#allocation2 + $0x60] sm:$0xff]
  %v51 = vld [vmem:[#allocation2 + $0x68] sm:$0xff]
  %v52 = vld [vmem:[#allocation2 + $0x70] sm:$0xff]
  %v53 = vld [vmem:[#allocation2 + $0x78] sm:$0xff]
  %v54 = vld [vmem:[%s0] sm:$0xf]
  %v55 = vld [vmem:[%s0 + $0x4] sm:$0xf]
  %v56 = vld [vmem:[%s0 + $0x8] sm:$0xf]
  %v57 = vld [vmem:[%s0 + $0xc] sm:$0xf]
  %v58 = vld [vmem:[%s0 + $0x10] sm:$0xf]
  %v59 = vld [vmem:[%s0 + $0x14] sm:$0xf]
  %v60 = vld [vmem:[%s0 + $0x18] sm:$0xf]
  %v61 = vld [vmem:[%s0 + $0x1c] sm:$0xf]
  %v62 = vld [vmem:[%s0 + $0x20] sm:$0xf]
  %v63 = vld [vmem:[%s0 + $0x24] sm:$0xf]
  %v64 = vld [vmem:[%s0 + $0x28] sm:$0xf]
  %v65 = vld [vmem:[%s0 + $0x2c] sm:$0xf]
  %v66 = vld [vmem:[%s0 + $0x30] sm:$0xf]
  %v67 = vld [vmem:[%s0 + $0x34] sm:$0xf]
  %v68 = vld [vmem:[%s0 + $0x38] sm:$0xf]
  %v69 = vld [vmem:[%s0 + $0x3c] sm:$0xf]
  %v70 = vld [vmem:[%s1] sm:$0xf]
  %v71 = vld [vmem:[%s1 + $0x4] sm:$0xf]
  %v72 = vld [vmem:[%s1 + $0x8] sm:$0xf]
  %v73 = vld [vmem:[%s1 + $0xc] sm:$0xf]
  %v74 = vld [vmem:[%s1 + $0x10] sm:$0xf]
  %v75 = vld [vmem:[%s1 + $0x14] sm:$0xf]
  %v76 = vld [vmem:[%s1 + $0x18] sm:$0xf]
  %v77 = vld [vmem:[%s1 + $0x1c] sm:$0xf]
  %v78 = vld [vmem:[%s1 + $0x20] sm:$0xf]
  %v79 = vld [vmem:[%s1 + $0x24] sm:$0xf]
  %v80 = vld [vmem:[%s1 + $0x28] sm:$0xf]
  %v81 = vld [vmem:[%s1 + $0x2c] sm:$0xf]
  %v82 = vld [vmem:[%s1 + $0x30] sm:$0xf]
  %v83 = vld [vmem:[%s1 + $0x34] sm:$0xf]
  %v84 = vld [vmem:[%s1 + $0x38] sm:$0xf]
  %v85 = vld [vmem:[%s1 + $0x3c] sm:$0xf]
  %v102 = vunpack.c.l.b16 %v54
  %v103 = vunpack.c.l.b16 %v55
  %v104 = vunpack.c.l.b16 %v56
  %v105 = vunpack.c.l.b16 %v57
  %v106 = vunpack.c.l.b16 %v58
  %v107 = vunpack.c.l.b16 %v59
  %v108 = vunpack.c.l.b16 %v60
  %v109 = vunpack.c.l.b16 %v61
  %v110 = vunpack.c.l.b16 %v62
  %v111 = vunpack.c.l.b16 %v63
  %v112 = vunpack.c.l.b16 %v64
  %v113 = vunpack.c.l.b16 %v65
  %v114 = vunpack.c.l.b16 %v66
  %v115 = vunpack.c.l.b16 %v67
  %v116 = vunpack.c.l.b16 %v68
  %v117 = vunpack.c.l.b16 %v69
  %v118 = vpack.c.b16 %v103, %v102
  %v119 = vpack.c.b16 %v105, %v104
  %v120 = vpack.c.b16 %v107, %v106
  %v121 = vpack.c.b16 %v109, %v108
  %v122 = vpack.c.b16 %v111, %v110
  %v123 = vpack.c.b16 %v113, %v112
  %v124 = vpack.c.b16 %v115, %v114
  %v125 = vpack.c.b16 %v117, %v116
  %v150 = vunpack.c.l.b16 %v70
  %v151 = vunpack.c.l.b16 %v71
  %v152 = vunpack.c.l.b16 %v72
  %v153 = vunpack.c.l.b16 %v73
  %v154 = vunpack.c.l.b16 %v74
  %v155 = vunpack.c.l.b16 %v75
  %v156 = vunpack.c.l.b16 %v76
  %v157 = vunpack.c.l.b16 %v77
  %v158 = vunpack.c.l.b16 %v78
  %v159 = vunpack.c.l.b16 %v79
  %v160 = vunpack.c.l.b16 %v80
  %v161 = vunpack.c.l.b16 %v81
  %v162 = vunpack.c.l.b16 %v82
  %v163 = vunpack.c.l.b16 %v83
  %v164 = vunpack.c.l.b16 %v84
  %v165 = vunpack.c.l.b16 %v85
  %v166 = vpack.c.b16 %v151, %v150
  %v167 = vpack.c.b16 %v153, %v152
  %v168 = vpack.c.b16 %v155, %v154
  %v169 = vpack.c.b16 %v157, %v156
  %v170 = vpack.c.b16 %v159, %v158
  %v171 = vpack.c.b16 %v161, %v160
  %v172 = vpack.c.b16 %v163, %v162
  %v173 = vpack.c.b16 %v165, %v164
  %182 = vmatprep.subr.bf16.mxu0 0
  %183 = vmatpush1.bf16.msra.mxu0 %v173
  %184 = vmatprep.subr.bf16.mxu0 0
  %185 = vmatpush1.bf16.msra.mxu0 %v172
  %186 = vmatprep.subr.bf16.mxu0 0
  %187 = vmatpush1.bf16.msra.mxu0 %v171
  %188 = vmatprep.subr.bf16.mxu0 0
  %189 = vmatpush1.bf16.msra.mxu0 %v170
  %190 = vmatprep.subr.bf16.mxu0 0
  %191 = vmatpush1.bf16.msra.mxu0 %v169
  %192 = vmatprep.subr.bf16.mxu0 0
  %193 = vmatpush1.bf16.msra.mxu0 %v168
  %194 = vmatprep.subr.bf16.mxu0 0
  %195 = vmatpush1.bf16.msra.mxu0 %v167
  %196 = vmatprep.subr.bf16.mxu0 0
  %197 = vmatpush1.bf16.msra.mxu0 %v166
  %198 = vmatprep.subr.bf16.mxu0 0
  %199 = vmatpush2.bf16.msra.mxu0 0
  %200 = vmatprep.subr.bf16.mxu0 0
  %201 = vmatpush2.bf16.msra.mxu0 0
  %202 = vmatprep.subr.bf16.mxu0 0
  %203 = vmatpush2.bf16.msra.mxu0 0
  %204 = vmatprep.subr.bf16.mxu0 0
  %205 = vmatpush2.bf16.msra.mxu0 0
  %206 = vmatprep.subr.bf16.mxu0 0
  %207 = vmatpush2.bf16.msra.mxu0 0
  %208 = vmatprep.subr.bf16.mxu0 0
  %209 = vmatpush2.bf16.msra.mxu0 0
  %210 = vmatprep.subr.bf16.mxu0 0
  %211 = vmatpush2.bf16.msra.mxu0 0
  %212 = vmatprep.subr.bf16.mxu0 0
  %213 = vmatpush2.bf16.msra.mxu0 0
  %214 = vmatprep.mubr.bf16.mxu0 0
  %215 = vmatmul.mubr.bf16.gmra.mxu0 %v118
  %v216 = vpop.f32.mrf.mxu0
  %v217 = vadd.f32 0.0, %v216
  %v218 = vpop.f32.mrf.mxu0
  %v219 = vpop.f32.mrf.mxu0
  %v220 = vadd.f32 0.0, %v219
  %v221 = vpop.f32.mrf.mxu0
  %222 = vmatprep.mubr.bf16.mxu0 0
  %223 = vmatmul.mubr.bf16.gmra.mxu0 %v119
  %v224 = vpop.f32.mrf.mxu0
  %v225 = vadd.f32 0.0, %v224
  %v226 = vpop.f32.mrf.mxu0
  %v227 = vpop.f32.mrf.mxu0
  %v228 = vadd.f32 0.0, %v227
  %v229 = vpop.f32.mrf.mxu0
  %230 = vmatprep.mubr.bf16.mxu0 0
  %231 = vmatmul.mubr.bf16.gmra.mxu0 %v120
  %v232 = vpop.f32.mrf.mxu0
  %v233 = vadd.f32 0.0, %v232
  %v234 = vpop.f32.mrf.mxu0
  %v235 = vpop.f32.mrf.mxu0
  %v236 = vadd.f32 0.0, %v235
  %v237 = vpop.f32.mrf.mxu0
  %238 = vmatprep.mubr.bf16.mxu0 0
  %239 = vmatmul.mubr.bf16.gmra.mxu0 %v121
  %v240 = vpop.f32.mrf.mxu0
  %v241 = vadd.f32 0.0, %v240
  %v242 = vpop.f32.mrf.mxu0
  %v243 = vpop.f32.mrf.mxu0
  %v244 = vadd.f32 0.0, %v243
  %v245 = vpop.f32.mrf.mxu0
  %246 = vmatprep.mubr.bf16.mxu0 0
  %247 = vmatmul.mubr.bf16.gmra.mxu0 %v122
  %v248 = vpop.f32.mrf.mxu0
  %v249 = vadd.f32 0.0, %v248
  %v250 = vpop.f32.mrf.mxu0
  %v251 = vpop.f32.mrf.mxu0
  %v252 = vadd.f32 0.0, %v251
  %v253 = vpop.f32.mrf.mxu0
  %254 = vmatprep.mubr.bf16.mxu0 0
  %255 = vmatmul.mubr.bf16.gmra.mxu0 %v123
  %v256 = vpop.f32.mrf.mxu0
  %v257 = vadd.f32 0.0, %v256
  %v258 = vpop.f32.mrf.mxu0
  %v259 = vpop.f32.mrf.mxu0
  %v260 = vadd.f32 0.0, %v259
  %v261 = vpop.f32.mrf.mxu0
  %262 = vmatprep.mubr.bf16.mxu0 0
  %263 = vmatmul.mubr.bf16.gmra.mxu0 %v124
  %v264 = vpop.f32.mrf.mxu0
  %v265 = vadd.f32 0.0, %v264
  %v266 = vpop.f32.mrf.mxu0
  %v267 = vpop.f32.mrf.mxu0
  %v268 = vadd.f32 0.0, %v267
  %v269 = vpop.f32.mrf.mxu0
  %270 = vmatprep.mubr.bf16.mxu0 0
  %271 = vmatmul.mubr.bf16.gmra.mxu0 %v125
  %v272 = vpop.f32.mrf.mxu0
  %v273 = vadd.f32 0.0, %v272
  %v274 = vpop.f32.mrf.mxu0
  %v275 = vpop.f32.mrf.mxu0
  %v276 = vadd.f32 0.0, %v275
  %v277 = vpop.f32.mrf.mxu0
  %278 = vdwg.mxu0
  %v279 = vadd.f32 %v38, %v217
  %v280 = vadd.f32 %v39, %v220
  %v281 = vadd.f32 %v40, %v225
  %v282 = vadd.f32 %v41, %v228
  %v283 = vadd.f32 %v42, %v233
  %v284 = vadd.f32 %v43, %v236
  %v285 = vadd.f32 %v44, %v241
  %v286 = vadd.f32 %v45, %v244
  %v287 = vadd.f32 %v46, %v249
  %v288 = vadd.f32 %v47, %v252
  %v289 = vadd.f32 %v48, %v257
  %v290 = vadd.f32 %v49, %v260
  %v291 = vadd.f32 %v50, %v265
  %v292 = vadd.f32 %v51, %v268
  %v293 = vadd.f32 %v52, %v273
  %v294 = vadd.f32 %v53, %v276
  %295 = vst [vmem:[#allocation2] sm:$0xff] %v279
  %296 = vst [vmem:[#allocation2 + $0x8] sm:$0xff] %v280
  %297 = vst [vmem:[#allocation2 + $0x10] sm:$0xff] %v281
  %298 = vst [vmem:[#allocation2 + $0x18] sm:$0xff] %v282
  %299 = vst [vmem:[#allocation2 + $0x20] sm:$0xff] %v283
  %300 = vst [vmem:[#allocation2 + $0x28] sm:$0xff] %v284
  %301 = vst [vmem:[#allocation2 + $0x30] sm:$0xff] %v285
  %302 = vst [vmem:[#allocation2 + $0x38] sm:$0xff] %v286
  %303 = vst [vmem:[#allocation2 + $0x40] sm:$0xff] %v287
  %304 = vst [vmem:[#allocation2 + $0x48] sm:$0xff] %v288
  %305 = vst [vmem:[#allocation2 + $0x50] sm:$0xff] %v289
  %306 = vst [vmem:[#allocation2 + $0x58] sm:$0xff] %v290
  %307 = vst [vmem:[#allocation2 + $0x60] sm:$0xff] %v291
  %308 = vst [vmem:[#allocation2 + $0x68] sm:$0xff] %v292
  %309 = vst [vmem:[#allocation2 + $0x70] sm:$0xff] %v293
  %310 = vst [vmem:[#allocation2 + $0x78] sm:$0xff] %v294
  // Predicated region
  $region22: #{csp_first_stage.6} parent=0 // pred_check
    %p311 = pneg %p18
  $region23: #{csp_first_stage.6} parent=0 // pred_check_branch
    %313 = sbr.rel (%p311) target = $region25
  $region24: #{csp_first_stage.6} parent=0 // pred_region
    %v314 = vld [vmem:[#allocation2] sm:$0xff]
    %v315 = vld [vmem:[#allocation2 + $0x8] sm:$0xff]
    %v316 = vld [vmem:[#allocation2 + $0x10] sm:$0xff]
    %v317 = vld [vmem:[#allocation2 + $0x18] sm:$0xff]
    %v318 = vld [vmem:[#allocation2 + $0x20] sm:$0xff]
    %v319 = vld [vmem:[#allocation2 + $0x28] sm:$0xff]
    %v320 = vld [vmem:[#allocation2 + $0x30] sm:$0xff]
    %v321 = vld [vmem:[#allocation2 + $0x38] sm:$0xff]
    %v322 = vld [vmem:[#allocation2 + $0x40] sm:$0xff]
    %v323 = vld [vmem:[#allocation2 + $0x48] sm:$0xff]
    %v324 = vld [vmem:[#allocation2 + $0x50] sm:$0xff]
    %v325 = vld [vmem:[#allocation2 + $0x58] sm:$0xff]
    %v326 = vld [vmem:[#allocation2 + $0x60] sm:$0xff]
    %v327 = vld [vmem:[#allocation2 + $0x68] sm:$0xff]
    %v328 = vld [vmem:[#allocation2 + $0x70] sm:$0xff]
    %v329 = vld [vmem:[#allocation2 + $0x78] sm:$0xff]
    %v330 = vld [vmem:[%s2] sm:$0x1]
    %v332 = vlaneseq
    %v333 = vshrl.u32 %v332, 7
    %v334 = vsub.s32 0, %v333
    %v335 = vrot.slane %v330, %v334
    %v337 = vmul.f32 %v314, %v335
    %v338 = vmul.f32 %v315, %v335
    %v339 = vmul.f32 %v316, %v335
    %v340 = vmul.f32 %v317, %v335
    %v341 = vmul.f32 %v318, %v335
    %v342 = vmul.f32 %v319, %v335
    %v343 = vmul.f32 %v320, %v335
    %v344 = vmul.f32 %v321, %v335
    %v345 = vmul.f32 %v322, %v335
    %v346 = vmul.f32 %v323, %v335
    %v347 = vmul.f32 %v324, %v335
    %v348 = vmul.f32 %v325, %v335
    %v349 = vmul.f32 %v326, %v335
    %v350 = vmul.f32 %v327, %v335
    %v351 = vmul.f32 %v328, %v335
    %v352 = vmul.f32 %v329, %v335
    %v353 = vld [vmem:[%s3] sm:$0x1]
    %v355 = vlaneseq
    %v356 = vshrl.u32 %v355, 7
    %v357 = vsub.s32 0, %v356
    %v358 = vrot.slane %v353, %v357
    %v360 = vadd.f32 %v337, %v358
    %v361 = vadd.f32 %v338, %v358
    %v362 = vadd.f32 %v339, %v358
    %v363 = vadd.f32 %v340, %v358
    %v364 = vadd.f32 %v341, %v358
    %v365 = vadd.f32 %v342, %v358
    %v366 = vadd.f32 %v343, %v358
    %v367 = vadd.f32 %v344, %v358
    %v368 = vadd.f32 %v345, %v358
    %v369 = vadd.f32 %v346, %v358
    %v370 = vadd.f32 %v347, %v358
    %v371 = vadd.f32 %v348, %v358
    %v372 = vadd.f32 %v349, %v358
    %v373 = vadd.f32 %v350, %v358
    %v374 = vadd.f32 %v351, %v358
    %v375 = vadd.f32 %v352, %v358
    %v376 = vmin.f32 %v360, 20.0
    %v377 = vmin.f32 %v361, 20.0
    %v378 = vmin.f32 %v362, 20.0
    %v379 = vmin.f32 %v363, 20.0
    %v380 = vmin.f32 %v364, 20.0
    %v381 = vmin.f32 %v365, 20.0
    %v382 = vmin.f32 %v366, 20.0
    %v383 = vmin.f32 %v367, 20.0
    %v384 = vmin.f32 %v368, 20.0
    %v385 = vmin.f32 %v369, 20.0
    %v386 = vmin.f32 %v370, 20.0
    %v387 = vmin.f32 %v371, 20.0
    %v388 = vmin.f32 %v372, 20.0
    %v389 = vmin.f32 %v373, 20.0
    %v390 = vmin.f32 %v374, 20.0
    %v391 = vmin.f32 %v375, 20.0
    %v392 = vmul.f32 %v376, 1.442695
    %v393 = vpow.pop %v392
    %v394 = vmul.f32 %v377, 1.442695
    %v395 = vpow.pop %v394
    %v396 = vmul.f32 %v378, 1.442695
    %v397 = vpow.pop %v396
    %v398 = vmul.f32 %v379, 1.442695
    %v399 = vpow.pop %v398
    %v400 = vmul.f32 %v380, 1.442695
    %v401 = vpow.pop %v400
    %v402 = vmul.f32 %v381, 1.442695
    %v403 = vpow.pop %v402
    %v404 = vmul.f32 %v382, 1.442695
    %v405 = vpow.pop %v404
    %v406 = vmul.f32 %v383, 1.442695
    %v407 = vpow.pop %v406
    %v408 = vmul.f32 %v384, 1.442695
    %v409 = vpow.pop %v408
    %v410 = vmul.f32 %v385, 1.442695
    %v411 = vpow.pop %v410
    %v412 = vmul.f32 %v386, 1.442695
    %v413 = vpow.pop %v412
    %v414 = vmul.f32 %v387, 1.442695
    %v415 = vpow.pop %v414
    %v416 = vmul.f32 %v388, 1.442695
    %v417 = vpow.pop %v416
    %v418 = vmul.f32 %v389, 1.442695
    %v419 = vpow.pop %v418
    %v420 = vmul.f32 %v390, 1.442695
    %v421 = vpow.pop %v420
    %v422 = vmul.f32 %v391, 1.442695
    %v423 = vpow.pop %v422
    %v424 = vadd.f32 %v393, 1.0
    %v425 = vlog2.pop %v424
    %v426 = vmul.f32 %v425, 0.6931472
    %v427 = vmul.f32 -0.5, %v393
    %v428 = vadd.f32 %v427, 1.0
    %v429 = vmul.f32 %v428, %v393
    %v430 = vand.u32 2147483647, %v393
    %vm431 = vcmp.lt.f32.partialorder %v430, 0.0004427343
    %v432 = vsel %vm431, %v429, %v426
    %v433 = vadd.f32 %v395, 1.0
    %v434 = vlog2.pop %v433
    %v435 = vmul.f32 %v434, 0.6931472
    %v436 = vmul.f32 -0.5, %v395
    %v437 = vadd.f32 %v436, 1.0
    %v438 = vmul.f32 %v437, %v395
    %v439 = vand.u32 2147483647, %v395
    %vm440 = vcmp.lt.f32.partialorder %v439, 0.0004427343
    %v441 = vsel %vm440, %v438, %v435
    %v442 = vadd.f32 %v397, 1.0
    %v443 = vlog2.pop %v442
    %v444 = vmul.f32 %v443, 0.6931472
    %v445 = vmul.f32 -0.5, %v397
    %v446 = vadd.f32 %v445, 1.0
    %v447 = vmul.f32 %v446, %v397
    %v448 = vand.u32 2147483647, %v397
    %vm449 = vcmp.lt.f32.partialorder %v448, 0.0004427343
    %v450 = vsel %vm449, %v447, %v444
    %v451 = vadd.f32 %v399, 1.0
    %v452 = vlog2.pop %v451
    %v453 = vmul.f32 %v452, 0.6931472
    %v454 = vmul.f32 -0.5, %v399
    %v455 = vadd.f32 %v454, 1.0
    %v456 = vmul.f32 %v455, %v399
    %v457 = vand.u32 2147483647, %v399
    %vm458 = vcmp.lt.f32.partialorder %v457, 0.0004427343
    %v459 = vsel %vm458, %v456, %v453
    %v460 = vadd.f32 %v401, 1.0
    %v461 = vlog2.pop %v460
    %v462 = vmul.f32 %v461, 0.6931472
    %v463 = vmul.f32 -0.5, %v401
    %v464 = vadd.f32 %v463, 1.0
    %v465 = vmul.f32 %v464, %v401
    %v466 = vand.u32 2147483647, %v401
    %vm467 = vcmp.lt.f32.partialorder %v466, 0.0004427343
    %v468 = vsel %vm467, %v465, %v462
    %v469 = vadd.f32 %v403, 1.0
    %v470 = vlog2.pop %v469
    %v471 = vmul.f32 %v470, 0.6931472
    %v472 = vmul.f32 -0.5, %v403
    %v473 = vadd.f32 %v472, 1.0
    %v474 = vmul.f32 %v473, %v403
    %v475 = vand.u32 2147483647, %v403
    %vm476 = vcmp.lt.f32.partialorder %v475, 0.0004427343
    %v477 = vsel %vm476, %v474, %v471
    %v478 = vadd.f32 %v405, 1.0
    %v479 = vlog2.pop %v478
    %v480 = vmul.f32 %v479, 0.6931472
    %v481 = vmul.f32 -0.5, %v405
    %v482 = vadd.f32 %v481, 1.0
    %v483 = vmul.f32 %v482, %v405
    %v484 = vand.u32 2147483647, %v405
    %vm485 = vcmp.lt.f32.partialorder %v484, 0.0004427343
    %v486 = vsel %vm485, %v483, %v480
    %v487 = vadd.f32 %v407, 1.0
    %v488 = vlog2.pop %v487
    %v489 = vmul.f32 %v488, 0.6931472
    %v490 = vmul.f32 -0.5, %v407
    %v491 = vadd.f32 %v490, 1.0
    %v492 = vmul.f32 %v491, %v407
    %v493 = vand.u32 2147483647, %v407
    %vm494 = vcmp.lt.f32.partialorder %v493, 0.0004427343
    %v495 = vsel %vm494, %v492, %v489
    %v496 = vadd.f32 %v409, 1.0
    %v497 = vlog2.pop %v496
    %v498 = vmul.f32 %v497, 0.6931472
    %v499 = vmul.f32 -0.5, %v409
    %v500 = vadd.f32 %v499, 1.0
    %v501 = vmul.f32 %v500, %v409
    %v502 = vand.u32 2147483647, %v409
    %vm503 = vcmp.lt.f32.partialorder %v502, 0.0004427343
    %v504 = vsel %vm503, %v501, %v498
    %v505 = vadd.f32 %v411, 1.0
    %v506 = vlog2.pop %v505
    %v507 = vmul.f32 %v506, 0.6931472
    %v508 = vmul.f32 -0.5, %v411
    %v509 = vadd.f32 %v508, 1.0
    %v510 = vmul.f32 %v509, %v411
    %v511 = vand.u32 2147483647, %v411
    %vm512 = vcmp.lt.f32.partialorder %v511, 0.0004427343
    %v513 = vsel %vm512, %v510, %v507
    %v514 = vadd.f32 %v413, 1.0
    %v515 = vlog2.pop %v514
    %v516 = vmul.f32 %v515, 0.6931472
    %v517 = vmul.f32 -0.5, %v413
    %v518 = vadd.f32 %v517, 1.0
    %v519 = vmul.f32 %v518, %v413
    %v520 = vand.u32 2147483647, %v413
    %vm521 = vcmp.lt.f32.partialorder %v520, 0.0004427343
    %v522 = vsel %vm521, %v519, %v516
    %v523 = vadd.f32 %v415, 1.0
    %v524 = vlog2.pop %v523
    %v525 = vmul.f32 %v524, 0.6931472
    %v526 = vmul.f32 -0.5, %v415
    %v527 = vadd.f32 %v526, 1.0
    %v528 = vmul.f32 %v527, %v415
    %v529 = vand.u32 2147483647, %v415
    %vm530 = vcmp.lt.f32.partialorder %v529, 0.0004427343
    %v531 = vsel %vm530, %v528, %v525
    %v532 = vadd.f32 %v417, 1.0
    %v533 = vlog2.pop %v532
    %v534 = vmul.f32 %v533, 0.6931472
    %v535 = vmul.f32 -0.5, %v417
    %v536 = vadd.f32 %v535, 1.0
    %v537 = vmul.f32 %v536, %v417
    %v538 = vand.u32 2147483647, %v417
    %vm539 = vcmp.lt.f32.partialorder %v538, 0.0004427343
    %v540 = vsel %vm539, %v537, %v534
    %v541 = vadd.f32 %v419, 1.0
    %v542 = vlog2.pop %v541
    %v543 = vmul.f32 %v542, 0.6931472
    %v544 = vmul.f32 -0.5, %v419
    %v545 = vadd.f32 %v544, 1.0
    %v546 = vmul.f32 %v545, %v419
    %v547 = vand.u32 2147483647, %v419
    %vm548 = vcmp.lt.f32.partialorder %v547, 0.0004427343
    %v549 = vsel %vm548, %v546, %v543
    %v550 = vadd.f32 %v421, 1.0
    %v551 = vlog2.pop %v550
    %v552 = vmul.f32 %v551, 0.6931472
    %v553 = vmul.f32 -0.5, %v421
    %v554 = vadd.f32 %v553, 1.0
    %v555 = vmul.f32 %v554, %v421
    %v556 = vand.u32 2147483647, %v421
    %vm557 = vcmp.lt.f32.partialorder %v556, 0.0004427343
    %v558 = vsel %vm557, %v555, %v552
    %v559 = vadd.f32 %v423, 1.0
    %v560 = vlog2.pop %v559
    %v561 = vmul.f32 %v560, 0.6931472
    %v562 = vmul.f32 -0.5, %v423
    %v563 = vadd.f32 %v562, 1.0
    %v564 = vmul.f32 %v563, %v423
    %v565 = vand.u32 2147483647, %v423
    %vm566 = vcmp.lt.f32.partialorder %v565, 0.0004427343
    %v567 = vsel %vm566, %v564, %v561
    %v568 = vtanh.pop %v432
    %v569 = vtanh.pop %v441
    %v570 = vtanh.pop %v450
    %v571 = vtanh.pop %v459
    %v572 = vtanh.pop %v468
    %v573 = vtanh.pop %v477
    %v574 = vtanh.pop %v486
    %v575 = vtanh.pop %v495
    %v576 = vtanh.pop %v504
    %v577 = vtanh.pop %v513
    %v578 = vtanh.pop %v522
    %v579 = vtanh.pop %v531
    %v580 = vtanh.pop %v540
    %v581 = vtanh.pop %v549
    %v582 = vtanh.pop %v558
    %v583 = vtanh.pop %v567
    %v584 = vmul.f32 %v360, %v568
    %v585 = vmul.f32 %v361, %v569
    %v586 = vmul.f32 %v362, %v570
    %v587 = vmul.f32 %v363, %v571
    %v588 = vmul.f32 %v364, %v572
    %v589 = vmul.f32 %v365, %v573
    %v590 = vmul.f32 %v366, %v574
    %v591 = vmul.f32 %v367, %v575
    %v592 = vmul.f32 %v368, %v576
    %v593 = vmul.f32 %v369, %v577
    %v594 = vmul.f32 %v370, %v578
    %v595 = vmul.f32 %v371, %v579
    %v596 = vmul.f32 %v372, %v580
    %v597 = vmul.f32 %v373, %v581
    %v598 = vmul.f32 %v374, %v582
    %v599 = vmul.f32 %v375, %v583
    %v600 = vpack.c.bf16 %v585, %v584
    %v601 = vpack.c.bf16 %v587, %v586
    %v602 = vpack.c.bf16 %v589, %v588
    %v603 = vpack.c.bf16 %v591, %v590
    %v604 = vpack.c.bf16 %v593, %v592
    %v605 = vpack.c.bf16 %v595, %v594
    %v606 = vpack.c.bf16 %v597, %v596
    %v607 = vpack.c.bf16 %v599, %v598
    %v616 = vunpack.c.l.b16 %v600
    %v617 = vunpack.c.h.b16 %v600
    %v618 = vunpack.c.l.b16 %v601
    %v619 = vunpack.c.h.b16 %v601
    %v620 = vunpack.c.l.b16 %v602
    %v621 = vunpack.c.h.b16 %v602
    %v622 = vunpack.c.l.b16 %v603
    %v623 = vunpack.c.h.b16 %v603
    %v624 = vunpack.c.l.b16 %v604
    %v625 = vunpack.c.h.b16 %v604
    %v626 = vunpack.c.l.b16 %v605
    %v627 = vunpack.c.h.b16 %v605
    %v628 = vunpack.c.l.b16 %v606
    %v629 = vunpack.c.h.b16 %v606
    %v630 = vunpack.c.l.b16 %v607
    %v631 = vunpack.c.h.b16 %v607
    %v632 = vpack.c.b16 %v616, %v616
    %v633 = vpack.c.b16 %v617, %v617
    %v634 = vpack.c.b16 %v618, %v618
    %v635 = vpack.c.b16 %v619, %v619
    %v636 = vpack.c.b16 %v620, %v620
    %v637 = vpack.c.b16 %v621, %v621
    %v638 = vpack.c.b16 %v622, %v622
    %v639 = vpack.c.b16 %v623, %v623
    %v640 = vpack.c.b16 %v624, %v624
    %v641 = vpack.c.b16 %v625, %v625
    %v642 = vpack.c.b16 %v626, %v626
    %v643 = vpack.c.b16 %v627, %v627
    %v644 = vpack.c.b16 %v628, %v628
    %v645 = vpack.c.b16 %v629, %v629
    %v646 = vpack.c.b16 %v630, %v630
    %v647 = vpack.c.b16 %v631, %v631
    %664 = vst [vmem:[%s4] sm:$0xf] %v632
    %665 = vst [vmem:[%s4 + $0x4] sm:$0xf] %v633
    %666 = vst [vmem:[%s4 + $0x8] sm:$0xf] %v634
    %667 = vst [vmem:[%s4 + $0xc] sm:$0xf] %v635
    %668 = vst [vmem:[%s4 + $0x10] sm:$0xf] %v636
    %669 = vst [vmem:[%s4 + $0x14] sm:$0xf] %v637
    %670 = vst [vmem:[%s4 + $0x18] sm:$0xf] %v638
    %671 = vst [vmem:[%s4 + $0x1c] sm:$0xf] %v639
    %672 = vst [vmem:[%s4 + $0x20] sm:$0xf] %v640
    %673 = vst [vmem:[%s4 + $0x24] sm:$0xf] %v641
    %674 = vst [vmem:[%s4 + $0x28] sm:$0xf] %v642
    %675 = vst [vmem:[%s4 + $0x2c] sm:$0xf] %v643
    %676 = vst [vmem:[%s4 + $0x30] sm:$0xf] %v644
    %677 = vst [vmem:[%s4 + $0x34] sm:$0xf] %v645
    %678 = vst [vmem:[%s4 + $0x38] sm:$0xf] %v646
    %679 = vst [vmem:[%s4 + $0x3c] sm:$0xf] %v647
  $region25: #{csp_first_stage.6} parent=0 // pred_fallthru
    _
  // Predicated region
  $region26: #{csp_first_stage.6} parent=0 // pred_check
    _
  $region27: #{csp_first_stage.6} parent=0 // pred_check_branch
    %681 = sbr.rel (0) target = $region29
  $region28: #{csp_first_stage.6} parent=0 // pred_region
    _
  $region29: #{csp_first_stage.6} parent=0 // pred_fallthru
    _
  // Predicated region
  $region30: #{csp_first_stage.6} parent=0 // pred_check
    _
  $region31: #{csp_first_stage.6} parent=0 // pred_check_branch
    %683 = sbr.rel (0) target = $region33
  $region32: #{csp_first_stage.6} parent=0 // pred_region
    _
  $region33: #{csp_first_stage.6} parent=0 // pred_fallthru
    _

// kernel: csp_first_stage.9
$region0: #{csp_first_stage.9}
  #allocation0 [shape = 'u32[]', space=smem, size = 0x4, offset = 0x4, fixed_abs, tag = 'smem constant byte address 0x4 - core index']
  #allocation1 [shape = 'u32[144,128]{1,0:T(1,128)}', space=vmem, size = 0x12000, scoped, tag = 'internal scratch']
  #allocation2 [shape = 'f32[128,128]{1,0:T(8,128)}', space=vmem, size = 0x10000, scoped, tag = 'scratch operand']
  %s0 = inlined_call_operand.vmem [shape: bf16[128,128], index: 0, kind: input, shape index: {}]
  %s1 = inlined_call_operand.vmem [shape: bf16[128,128], index: 1, kind: input, shape index: {}]
  %s2 = inlined_call_operand.vmem [shape: f32[1,128], index: 2, kind: input, shape index: {}]
  %s3 = inlined_call_operand.vmem [shape: f32[1,128], index: 3, kind: input, shape index: {}]
  %s4 = inlined_call_operand.vmem [shape: bf16[128,128], index: 4, kind: input, shape index: {}]
  %s5 = inlined_call_operand.vmem [shape: bf16[128,128], index: 5, kind: output, shape index: {}]
  %s6 = sld [smem:[#allocation0]]
  $region38: #{csp_first_stage.9} parent=0
    _
  %s8 = ssub.s32 1, %s6
  %s9 = scalar_select 0, %s8, %s6
  // Predicated region
  $region2: #{csp_first_stage.9} parent=0 // pred_check
    _
  $region3: #{csp_first_stage.9} parent=0 // pred_check_branch
    %11 = sbr.rel (0) target = $region5
  $region4: #{csp_first_stage.9} parent=0 // pred_region
    _
  $region5: #{csp_first_stage.9} parent=0 // pred_fallthru
    _
  // Predicated region
  $region6: #{csp_first_stage.9} parent=0 // pred_check
    _
  $region7: #{csp_first_stage.9} parent=0 // pred_check_branch
    %13 = sbr.rel (0) target = $region9
  $region8: #{csp_first_stage.9} parent=0 // pred_region
    _
  $region9: #{csp_first_stage.9} parent=0 // pred_fallthru
    _
  // Predicated region
  $region10: #{csp_first_stage.9} parent=0 // pred_check
    _
  $region11: #{csp_first_stage.9} parent=0 // pred_check_branch
    %15 = sbr.rel (0) target = $region13
  $region12: #{csp_first_stage.9} parent=0 // pred_region
    _
  $region13: #{csp_first_stage.9} parent=0 // pred_fallthru
    _
  // Predicated region
  $region14: #{csp_first_stage.9} parent=0 // pred_check
    _
  $region15: #{csp_first_stage.9} parent=0 // pred_check_branch
    %17 = sbr.rel (0) target = $region17
  $region16: #{csp_first_stage.9} parent=0 // pred_region
    _
  $region17: #{csp_first_stage.9} parent=0 // pred_fallthru
    _
  // Predicated region
  $region18: #{csp_first_stage.9} parent=0 // pred_check
    _
  $region19: #{csp_first_stage.9} parent=0 // pred_check_branch
    %19 = sbr.rel (0) target = $region21
  $region20: #{csp_first_stage.9} parent=0 // pred_region
    _
  $region21: #{csp_first_stage.9} parent=0 // pred_fallthru
    _
  %p21 = scmp.eq.s32.totalorder 0, 0
  // Predicated region
  $region22: #{csp_first_stage.9} parent=0 // pred_check
    %p22 = pneg %p21
  $region23: #{csp_first_stage.9} parent=0 // pred_check_branch
    %24 = sbr.rel (%p22) target = $region25
  $region24: #{csp_first_stage.9} parent=0 // pred_region
    %25 = vst [vmem:[#allocation2] sm:$0xff] 0.0
    %26 = vst [vmem:[#allocation2 + $0x8] sm:$0xff] 0.0
    %27 = vst [vmem:[#allocation2 + $0x10] sm:$0xff] 0.0
    %28 = vst [vmem:[#allocation2 + $0x18] sm:$0xff] 0.0
    %29 = vst [vmem:[#allocation2 + $0x20] sm:$0xff] 0.0
    %30 = vst [vmem:[#allocation2 + $0x28] sm:$0xff] 0.0
    %31 = vst [vmem:[#allocation2 + $0x30] sm:$0xff] 0.0
    %32 = vst [vmem:[#allocation2 + $0x38] sm:$0xff] 0.0
    %33 = vst [vmem:[#allocation2 + $0x40] sm:$0xff] 0.0
    %34 = vst [vmem:[#allocation2 + $0x48] sm:$0xff] 0.0
    %35 = vst [vmem:[#allocation2 + $0x50] sm:$0xff] 0.0
    %36 = vst [vmem:[#allocation2 + $0x58] sm:$0xff] 0.0
    %37 = vst [vmem:[#allocation2 + $0x60] sm:$0xff] 0.0
    %38 = vst [vmem:[#allocation2 + $0x68] sm:$0xff] 0.0
    %39 = vst [vmem:[#allocation2 + $0x70] sm:$0xff] 0.0
    %40 = vst [vmem:[#allocation2 + $0x78] sm:$0xff] 0.0
  $region25: #{csp_first_stage.9} parent=0 // pred_fallthru
    _
  %v41 = vld [vmem:[#allocation2] sm:$0xff]
  %v42 = vld [vmem:[#allocation2 + $0x8] sm:$0xff]
  %v43 = vld [vmem:[#allocation2 + $0x10] sm:$0xff]
  %v44 = vld [vmem:[#allocation2 + $0x18] sm:$0xff]
  %v45 = vld [vmem:[#allocation2 + $0x20] sm:$0xff]
  %v46 = vld [vmem:[#allocation2 + $0x28] sm:$0xff]
  %v47 = vld [vmem:[#allocation2 + $0x30] sm:$0xff]
  %v48 = vld [vmem:[#allocation2 + $0x38] sm:$0xff]
  %v49 = vld [vmem:[#allocation2 + $0x40] sm:$0xff]
  %v50 = vld [vmem:[#allocation2 + $0x48] sm:$0xff]
  %v51 = vld [vmem:[#allocation2 + $0x50] sm:$0xff]
  %v52 = vld [vmem:[#allocation2 + $0x58] sm:$0xff]
  %v53 = vld [vmem:[#allocation2 + $0x60] sm:$0xff]
  %v54 = vld [vmem:[#allocation2 + $0x68] sm:$0xff]
  %v55 = vld [vmem:[#allocation2 + $0x70] sm:$0xff]
  %v56 = vld [vmem:[#allocation2 + $0x78] sm:$0xff]
  %v57 = vld [vmem:[%s0] sm:$0xf]
  %v58 = vld [vmem:[%s0 + $0x4] sm:$0xf]
  %v59 = vld [vmem:[%s0 + $0x8] sm:$0xf]
  %v60 = vld [vmem:[%s0 + $0xc] sm:$0xf]
  %v61 = vld [vmem:[%s0 + $0x10] sm:$0xf]
  %v62 = vld [vmem:[%s0 + $0x14] sm:$0xf]
  %v63 = vld [vmem:[%s0 + $0x18] sm:$0xf]
  %v64 = vld [vmem:[%s0 + $0x1c] sm:$0xf]
  %v65 = vld [vmem:[%s0 + $0x20] sm:$0xf]
  %v66 = vld [vmem:[%s0 + $0x24] sm:$0xf]
  %v67 = vld [vmem:[%s0 + $0x28] sm:$0xf]
  %v68 = vld [vmem:[%s0 + $0x2c] sm:$0xf]
  %v69 = vld [vmem:[%s0 + $0x30] sm:$0xf]
  %v70 = vld [vmem:[%s0 + $0x34] sm:$0xf]
  %v71 = vld [vmem:[%s0 + $0x38] sm:$0xf]
  %v72 = vld [vmem:[%s0 + $0x3c] sm:$0xf]
  %v73 = vld [vmem:[%s1] sm:$0xf]
  %v74 = vld [vmem:[%s1 + $0x4] sm:$0xf]
  %v75 = vld [vmem:[%s1 + $0x8] sm:$0xf]
  %v76 = vld [vmem:[%s1 + $0xc] sm:$0xf]
  %v77 = vld [vmem:[%s1 + $0x10] sm:$0xf]
  %v78 = vld [vmem:[%s1 + $0x14] sm:$0xf]
  %v79 = vld [vmem:[%s1 + $0x18] sm:$0xf]
  %v80 = vld [vmem:[%s1 + $0x1c] sm:$0xf]
  %v81 = vld [vmem:[%s1 + $0x20] sm:$0xf]
  %v82 = vld [vmem:[%s1 + $0x24] sm:$0xf]
  %v83 = vld [vmem:[%s1 + $0x28] sm:$0xf]
  %v84 = vld [vmem:[%s1 + $0x2c] sm:$0xf]
  %v85 = vld [vmem:[%s1 + $0x30] sm:$0xf]
  %v86 = vld [vmem:[%s1 + $0x34] sm:$0xf]
  %v87 = vld [vmem:[%s1 + $0x38] sm:$0xf]
  %v88 = vld [vmem:[%s1 + $0x3c] sm:$0xf]
  %v105 = vunpack.c.l.b16 %v57
  %v106 = vunpack.c.l.b16 %v58
  %v107 = vunpack.c.l.b16 %v59
  %v108 = vunpack.c.l.b16 %v60
  %v109 = vunpack.c.l.b16 %v61
  %v110 = vunpack.c.l.b16 %v62
  %v111 = vunpack.c.l.b16 %v63
  %v112 = vunpack.c.l.b16 %v64
  %v113 = vunpack.c.l.b16 %v65
  %v114 = vunpack.c.l.b16 %v66
  %v115 = vunpack.c.l.b16 %v67
  %v116 = vunpack.c.l.b16 %v68
  %v117 = vunpack.c.l.b16 %v69
  %v118 = vunpack.c.l.b16 %v70
  %v119 = vunpack.c.l.b16 %v71
  %v120 = vunpack.c.l.b16 %v72
  %v121 = vpack.c.b16 %v106, %v105
  %v122 = vpack.c.b16 %v108, %v107
  %v123 = vpack.c.b16 %v110, %v109
  %v124 = vpack.c.b16 %v112, %v111
  %v125 = vpack.c.b16 %v114, %v113
  %v126 = vpack.c.b16 %v116, %v115
  %v127 = vpack.c.b16 %v118, %v117
  %v128 = vpack.c.b16 %v120, %v119
  %v153 = vunpack.c.l.b16 %v73
  %v154 = vunpack.c.l.b16 %v74
  %v155 = vunpack.c.l.b16 %v75
  %v156 = vunpack.c.l.b16 %v76
  %v157 = vunpack.c.l.b16 %v77
  %v158 = vunpack.c.l.b16 %v78
  %v159 = vunpack.c.l.b16 %v79
  %v160 = vunpack.c.l.b16 %v80
  %v161 = vunpack.c.l.b16 %v81
  %v162 = vunpack.c.l.b16 %v82
  %v163 = vunpack.c.l.b16 %v83
  %v164 = vunpack.c.l.b16 %v84
  %v165 = vunpack.c.l.b16 %v85
  %v166 = vunpack.c.l.b16 %v86
  %v167 = vunpack.c.l.b16 %v87
  %v168 = vunpack.c.l.b16 %v88
  %v169 = vpack.c.b16 %v154, %v153
  %v170 = vpack.c.b16 %v156, %v155
  %v171 = vpack.c.b16 %v158, %v157
  %v172 = vpack.c.b16 %v160, %v159
  %v173 = vpack.c.b16 %v162, %v161
  %v174 = vpack.c.b16 %v164, %v163
  %v175 = vpack.c.b16 %v166, %v165
  %v176 = vpack.c.b16 %v168, %v167
  %185 = vmatprep.subr.bf16.mxu0 0
  %186 = vmatpush1.bf16.msra.mxu0 %v176
  %187 = vmatprep.subr.bf16.mxu0 0
  %188 = vmatpush1.bf16.msra.mxu0 %v175
  %189 = vmatprep.subr.bf16.mxu0 0
  %190 = vmatpush1.bf16.msra.mxu0 %v174
  %191 = vmatprep.subr.bf16.mxu0 0
  %192 = vmatpush1.bf16.msra.mxu0 %v173
  %193 = vmatprep.subr.bf16.mxu0 0
  %194 = vmatpush1.bf16.msra.mxu0 %v172
  %195 = vmatprep.subr.bf16.mxu0 0
  %196 = vmatpush1.bf16.msra.mxu0 %v171
  %197 = vmatprep.subr.bf16.mxu0 0
  %198 = vmatpush1.bf16.msra.mxu0 %v170
  %199 = vmatprep.subr.bf16.mxu0 0
  %200 = vmatpush1.bf16.msra.mxu0 %v169
  %201 = vmatprep.subr.bf16.mxu0 0
  %202 = vmatpush2.bf16.msra.mxu0 0
  %203 = vmatprep.subr.bf16.mxu0 0
  %204 = vmatpush2.bf16.msra.mxu0 0
  %205 = vmatprep.subr.bf16.mxu0 0
  %206 = vmatpush2.bf16.msra.mxu0 0
  %207 = vmatprep.subr.bf16.mxu0 0
  %208 = vmatpush2.bf16.msra.mxu0 0
  %209 = vmatprep.subr.bf16.mxu0 0
  %210 = vmatpush2.bf16.msra.mxu0 0
  %211 = vmatprep.subr.bf16.mxu0 0
  %212 = vmatpush2.bf16.msra.mxu0 0
  %213 = vmatprep.subr.bf16.mxu0 0
  %214 = vmatpush2.bf16.msra.mxu0 0
  %215 = vmatprep.subr.bf16.mxu0 0
  %216 = vmatpush2.bf16.msra.mxu0 0
  %217 = vmatprep.mubr.bf16.mxu0 0
  %218 = vmatmul.mubr.bf16.gmra.mxu0 %v121
  %v219 = vpop.f32.mrf.mxu0
  %v220 = vadd.f32 0.0, %v219
  %v221 = vpop.f32.mrf.mxu0
  %v222 = vpop.f32.mrf.mxu0
  %v223 = vadd.f32 0.0, %v222
  %v224 = vpop.f32.mrf.mxu0
  %225 = vmatprep.mubr.bf16.mxu0 0
  %226 = vmatmul.mubr.bf16.gmra.mxu0 %v122
  %v227 = vpop.f32.mrf.mxu0
  %v228 = vadd.f32 0.0, %v227
  %v229 = vpop.f32.mrf.mxu0
  %v230 = vpop.f32.mrf.mxu0
  %v231 = vadd.f32 0.0, %v230
  %v232 = vpop.f32.mrf.mxu0
  %233 = vmatprep.mubr.bf16.mxu0 0
  %234 = vmatmul.mubr.bf16.gmra.mxu0 %v123
  %v235 = vpop.f32.mrf.mxu0
  %v236 = vadd.f32 0.0, %v235
  %v237 = vpop.f32.mrf.mxu0
  %v238 = vpop.f32.mrf.mxu0
  %v239 = vadd.f32 0.0, %v238
  %v240 = vpop.f32.mrf.mxu0
  %241 = vmatprep.mubr.bf16.mxu0 0
  %242 = vmatmul.mubr.bf16.gmra.mxu0 %v124
  %v243 = vpop.f32.mrf.mxu0
  %v244 = vadd.f32 0.0, %v243
  %v245 = vpop.f32.mrf.mxu0
  %v246 = vpop.f32.mrf.mxu0
  %v247 = vadd.f32 0.0, %v246
  %v248 = vpop.f32.mrf.mxu0
  %249 = vmatprep.mubr.bf16.mxu0 0
  %250 = vmatmul.mubr.bf16.gmra.mxu0 %v125
  %v251 = vpop.f32.mrf.mxu0
  %v252 = vadd.f32 0.0, %v251
  %v253 = vpop.f32.mrf.mxu0
  %v254 = vpop.f32.mrf.mxu0
  %v255 = vadd.f32 0.0, %v254
  %v256 = vpop.f32.mrf.mxu0
  %257 = vmatprep.mubr.bf16.mxu0 0
  %258 = vmatmul.mubr.bf16.gmra.mxu0 %v126
  %v259 = vpop.f32.mrf.mxu0
  %v260 = vadd.f32 0.0, %v259
  %v261 = vpop.f32.mrf.mxu0
  %v262 = vpop.f32.mrf.mxu0
  %v263 = vadd.f32 0.0, %v262
  %v264 = vpop.f32.mrf.mxu0
  %265 = vmatprep.mubr.bf16.mxu0 0
  %266 = vmatmul.mubr.bf16.gmra.mxu0 %v127
  %v267 = vpop.f32.mrf.mxu0
  %v268 = vadd.f32 0.0, %v267
  %v269 = vpop.f32.mrf.mxu0
  %v270 = vpop.f32.mrf.mxu0
  %v271 = vadd.f32 0.0, %v270
  %v272 = vpop.f32.mrf.mxu0
  %273 = vmatprep.mubr.bf16.mxu0 0
  %274 = vmatmul.mubr.bf16.gmra.mxu0 %v128
  %v275 = vpop.f32.mrf.mxu0
  %v276 = vadd.f32 0.0, %v275
  %v277 = vpop.f32.mrf.mxu0
  %v278 = vpop.f32.mrf.mxu0
  %v279 = vadd.f32 0.0, %v278
  %v280 = vpop.f32.mrf.mxu0
  %281 = vdwg.mxu0
  %v282 = vadd.f32 %v41, %v220
  %v283 = vadd.f32 %v42, %v223
  %v284 = vadd.f32 %v43, %v228
  %v285 = vadd.f32 %v44, %v231
  %v286 = vadd.f32 %v45, %v236
  %v287 = vadd.f32 %v46, %v239
  %v288 = vadd.f32 %v47, %v244
  %v289 = vadd.f32 %v48, %v247
  %v290 = vadd.f32 %v49, %v252
  %v291 = vadd.f32 %v50, %v255
  %v292 = vadd.f32 %v51, %v260
  %v293 = vadd.f32 %v52, %v263
  %v294 = vadd.f32 %v53, %v268
  %v295 = vadd.f32 %v54, %v271
  %v296 = vadd.f32 %v55, %v276
  %v297 = vadd.f32 %v56, %v279
  %298 = vst [vmem:[#allocation2] sm:$0xff] %v282
  %299 = vst [vmem:[#allocation2 + $0x8] sm:$0xff] %v283
  %300 = vst [vmem:[#allocation2 + $0x10] sm:$0xff] %v284
  %301 = vst [vmem:[#allocation2 + $0x18] sm:$0xff] %v285
  %302 = vst [vmem:[#allocation2 + $0x20] sm:$0xff] %v286
  %303 = vst [vmem:[#allocation2 + $0x28] sm:$0xff] %v287
  %304 = vst [vmem:[#allocation2 + $0x30] sm:$0xff] %v288
  %305 = vst [vmem:[#allocation2 + $0x38] sm:$0xff] %v289
  %306 = vst [vmem:[#allocation2 + $0x40] sm:$0xff] %v290
  %307 = vst [vmem:[#allocation2 + $0x48] sm:$0xff] %v291
  %308 = vst [vmem:[#allocation2 + $0x50] sm:$0xff] %v292
  %309 = vst [vmem:[#allocation2 + $0x58] sm:$0xff] %v293
  %310 = vst [vmem:[#allocation2 + $0x60] sm:$0xff] %v294
  %311 = vst [vmem:[#allocation2 + $0x68] sm:$0xff] %v295
  %312 = vst [vmem:[#allocation2 + $0x70] sm:$0xff] %v296
  %313 = vst [vmem:[#allocation2 + $0x78] sm:$0xff] %v297
  // Predicated region
  $region26: #{csp_first_stage.9} parent=0 // pred_check
    %p314 = pneg %p21
  $region27: #{csp_first_stage.9} parent=0 // pred_check_branch
    %316 = sbr.rel (%p314) target = $region29
  $region28: #{csp_first_stage.9} parent=0 // pred_region
    %v317 = vld [vmem:[#allocation2] sm:$0xff]
    %v318 = vld [vmem:[#allocation2 + $0x8] sm:$0xff]
    %v319 = vld [vmem:[#allocation2 + $0x10] sm:$0xff]
    %v320 = vld [vmem:[#allocation2 + $0x18] sm:$0xff]
    %v321 = vld [vmem:[#allocation2 + $0x20] sm:$0xff]
    %v322 = vld [vmem:[#allocation2 + $0x28] sm:$0xff]
    %v323 = vld [vmem:[#allocation2 + $0x30] sm:$0xff]
    %v324 = vld [vmem:[#allocation2 + $0x38] sm:$0xff]
    %v325 = vld [vmem:[#allocation2 + $0x40] sm:$0xff]
    %v326 = vld [vmem:[#allocation2 + $0x48] sm:$0xff]
    %v327 = vld [vmem:[#allocation2 + $0x50] sm:$0xff]
    %v328 = vld [vmem:[#allocation2 + $0x58] sm:$0xff]
    %v329 = vld [vmem:[#allocation2 + $0x60] sm:$0xff]
    %v330 = vld [vmem:[#allocation2 + $0x68] sm:$0xff]
    %v331 = vld [vmem:[#allocation2 + $0x70] sm:$0xff]
    %v332 = vld [vmem:[#allocation2 + $0x78] sm:$0xff]
    %v333 = vld [vmem:[%s2] sm:$0x1]
    %v335 = vlaneseq
    %v336 = vshrl.u32 %v335, 7
    %v337 = vsub.s32 0, %v336
    %v338 = vrot.slane %v333, %v337
    %v340 = vmul.f32 %v317, %v338
    %v341 = vmul.f32 %v318, %v338
    %v342 = vmul.f32 %v319, %v338
    %v343 = vmul.f32 %v320, %v338
    %v344 = vmul.f32 %v321, %v338
    %v345 = vmul.f32 %v322, %v338
    %v346 = vmul.f32 %v323, %v338
    %v347 = vmul.f32 %v324, %v338
    %v348 = vmul.f32 %v325, %v338
    %v349 = vmul.f32 %v326, %v338
    %v350 = vmul.f32 %v327, %v338
    %v351 = vmul.f32 %v328, %v338
    %v352 = vmul.f32 %v329, %v338
    %v353 = vmul.f32 %v330, %v338
    %v354 = vmul.f32 %v331, %v338
    %v355 = vmul.f32 %v332, %v338
    %v356 = vld [vmem:[%s3] sm:$0x1]
    %v358 = vlaneseq
    %v359 = vshrl.u32 %v358, 7
    %v360 = vsub.s32 0, %v359
    %v361 = vrot.slane %v356, %v360
    %v363 = vadd.f32 %v340, %v361
    %v364 = vadd.f32 %v341, %v361
    %v365 = vadd.f32 %v342, %v361
    %v366 = vadd.f32 %v343, %v361
    %v367 = vadd.f32 %v344, %v361
    %v368 = vadd.f32 %v345, %v361
    %v369 = vadd.f32 %v346, %v361
    %v370 = vadd.f32 %v347, %v361
    %v371 = vadd.f32 %v348, %v361
    %v372 = vadd.f32 %v349, %v361
    %v373 = vadd.f32 %v350, %v361
    %v374 = vadd.f32 %v351, %v361
    %v375 = vadd.f32 %v352, %v361
    %v376 = vadd.f32 %v353, %v361
    %v377 = vadd.f32 %v354, %v361
    %v378 = vadd.f32 %v355, %v361
    %v379 = vmin.f32 %v363, 20.0
    %v380 = vmin.f32 %v364, 20.0
    %v381 = vmin.f32 %v365, 20.0
    %v382 = vmin.f32 %v366, 20.0
    %v383 = vmin.f32 %v367, 20.0
    %v384 = vmin.f32 %v368, 20.0
    %v385 = vmin.f32 %v369, 20.0
    %v386 = vmin.f32 %v370, 20.0
    %v387 = vmin.f32 %v371, 20.0
    %v388 = vmin.f32 %v372, 20.0
    %v389 = vmin.f32 %v373, 20.0
    %v390 = vmin.f32 %v374, 20.0
    %v391 = vmin.f32 %v375, 20.0
    %v392 = vmin.f32 %v376, 20.0
    %v393 = vmin.f32 %v377, 20.0
    %v394 = vmin.f32 %v378, 20.0
    %v395 = vmul.f32 %v379, 1.442695
    %v396 = vpow.pop %v395
    %v397 = vmul.f32 %v380, 1.442695
    %v398 = vpow.pop %v397
    %v399 = vmul.f32 %v381, 1.442695
    %v400 = vpow.pop %v399
    %v401 = vmul.f32 %v382, 1.442695
    %v402 = vpow.pop %v401
    %v403 = vmul.f32 %v383, 1.442695
    %v404 = vpow.pop %v403
    %v405 = vmul.f32 %v384, 1.442695
    %v406 = vpow.pop %v405
    %v407 = vmul.f32 %v385, 1.442695
    %v408 = vpow.pop %v407
    %v409 = vmul.f32 %v386, 1.442695
    %v410 = vpow.pop %v409
    %v411 = vmul.f32 %v387, 1.442695
    %v412 = vpow.pop %v411
    %v413 = vmul.f32 %v388, 1.442695
    %v414 = vpow.pop %v413
    %v415 = vmul.f32 %v389, 1.442695
    %v416 = vpow.pop %v415
    %v417 = vmul.f32 %v390, 1.442695
    %v418 = vpow.pop %v417
    %v419 = vmul.f32 %v391, 1.442695
    %v420 = vpow.pop %v419
    %v421 = vmul.f32 %v392, 1.442695
    %v422 = vpow.pop %v421
    %v423 = vmul.f32 %v393, 1.442695
    %v424 = vpow.pop %v423
    %v425 = vmul.f32 %v394, 1.442695
    %v426 = vpow.pop %v425
    %v427 = vadd.f32 %v396, 1.0
    %v428 = vlog2.pop %v427
    %v429 = vmul.f32 %v428, 0.6931472
    %v430 = vmul.f32 -0.5, %v396
    %v431 = vadd.f32 %v430, 1.0
    %v432 = vmul.f32 %v431, %v396
    %v433 = vand.u32 2147483647, %v396
    %vm434 = vcmp.lt.f32.partialorder %v433, 0.0004427343
    %v435 = vsel %vm434, %v432, %v429
    %v436 = vadd.f32 %v398, 1.0
    %v437 = vlog2.pop %v436
    %v438 = vmul.f32 %v437, 0.6931472
    %v439 = vmul.f32 -0.5, %v398
    %v440 = vadd.f32 %v439, 1.0
    %v441 = vmul.f32 %v440, %v398
    %v442 = vand.u32 2147483647, %v398
    %vm443 = vcmp.lt.f32.partialorder %v442, 0.0004427343
    %v444 = vsel %vm443, %v441, %v438
    %v445 = vadd.f32 %v400, 1.0
    %v446 = vlog2.pop %v445
    %v447 = vmul.f32 %v446, 0.6931472
    %v448 = vmul.f32 -0.5, %v400
    %v449 = vadd.f32 %v448, 1.0
    %v450 = vmul.f32 %v449, %v400
    %v451 = vand.u32 2147483647, %v400
    %vm452 = vcmp.lt.f32.partialorder %v451, 0.0004427343
    %v453 = vsel %vm452, %v450, %v447
    %v454 = vadd.f32 %v402, 1.0
    %v455 = vlog2.pop %v454
    %v456 = vmul.f32 %v455, 0.6931472
    %v457 = vmul.f32 -0.5, %v402
    %v458 = vadd.f32 %v457, 1.0
    %v459 = vmul.f32 %v458, %v402
    %v460 = vand.u32 2147483647, %v402
    %vm461 = vcmp.lt.f32.partialorder %v460, 0.0004427343
    %v462 = vsel %vm461, %v459, %v456
    %v463 = vadd.f32 %v404, 1.0
    %v464 = vlog2.pop %v463
    %v465 = vmul.f32 %v464, 0.6931472
    %v466 = vmul.f32 -0.5, %v404
    %v467 = vadd.f32 %v466, 1.0
    %v468 = vmul.f32 %v467, %v404
    %v469 = vand.u32 2147483647, %v404
    %vm470 = vcmp.lt.f32.partialorder %v469, 0.0004427343
    %v471 = vsel %vm470, %v468, %v465
    %v472 = vadd.f32 %v406, 1.0
    %v473 = vlog2.pop %v472
    %v474 = vmul.f32 %v473, 0.6931472
    %v475 = vmul.f32 -0.5, %v406
    %v476 = vadd.f32 %v475, 1.0
    %v477 = vmul.f32 %v476, %v406
    %v478 = vand.u32 2147483647, %v406
    %vm479 = vcmp.lt.f32.partialorder %v478, 0.0004427343
    %v480 = vsel %vm479, %v477, %v474
    %v481 = vadd.f32 %v408, 1.0
    %v482 = vlog2.pop %v481
    %v483 = vmul.f32 %v482, 0.6931472
    %v484 = vmul.f32 -0.5, %v408
    %v485 = vadd.f32 %v484, 1.0
    %v486 = vmul.f32 %v485, %v408
    %v487 = vand.u32 2147483647, %v408
    %vm488 = vcmp.lt.f32.partialorder %v487, 0.0004427343
    %v489 = vsel %vm488, %v486, %v483
    %v490 = vadd.f32 %v410, 1.0
    %v491 = vlog2.pop %v490
    %v492 = vmul.f32 %v491, 0.6931472
    %v493 = vmul.f32 -0.5, %v410
    %v494 = vadd.f32 %v493, 1.0
    %v495 = vmul.f32 %v494, %v410
    %v496 = vand.u32 2147483647, %v410
    %vm497 = vcmp.lt.f32.partialorder %v496, 0.0004427343
    %v498 = vsel %vm497, %v495, %v492
    %v499 = vadd.f32 %v412, 1.0
    %v500 = vlog2.pop %v499
    %v501 = vmul.f32 %v500, 0.6931472
    %v502 = vmul.f32 -0.5, %v412
    %v503 = vadd.f32 %v502, 1.0
    %v504 = vmul.f32 %v503, %v412
    %v505 = vand.u32 2147483647, %v412
    %vm506 = vcmp.lt.f32.partialorder %v505, 0.0004427343
    %v507 = vsel %vm506, %v504, %v501
    %v508 = vadd.f32 %v414, 1.0
    %v509 = vlog2.pop %v508
    %v510 = vmul.f32 %v509, 0.6931472
    %v511 = vmul.f32 -0.5, %v414
    %v512 = vadd.f32 %v511, 1.0
    %v513 = vmul.f32 %v512, %v414
    %v514 = vand.u32 2147483647, %v414
    %vm515 = vcmp.lt.f32.partialorder %v514, 0.0004427343
    %v516 = vsel %vm515, %v513, %v510
    %v517 = vadd.f32 %v416, 1.0
    %v518 = vlog2.pop %v517
    %v519 = vmul.f32 %v518, 0.6931472
    %v520 = vmul.f32 -0.5, %v416
    %v521 = vadd.f32 %v520, 1.0
    %v522 = vmul.f32 %v521, %v416
    %v523 = vand.u32 2147483647, %v416
    %vm524 = vcmp.lt.f32.partialorder %v523, 0.0004427343
    %v525 = vsel %vm524, %v522, %v519
    %v526 = vadd.f32 %v418, 1.0
    %v527 = vlog2.pop %v526
    %v528 = vmul.f32 %v527, 0.6931472
    %v529 = vmul.f32 -0.5, %v418
    %v530 = vadd.f32 %v529, 1.0
    %v531 = vmul.f32 %v530, %v418
    %v532 = vand.u32 2147483647, %v418
    %vm533 = vcmp.lt.f32.partialorder %v532, 0.0004427343
    %v534 = vsel %vm533, %v531, %v528
    %v535 = vadd.f32 %v420, 1.0
    %v536 = vlog2.pop %v535
    %v537 = vmul.f32 %v536, 0.6931472
    %v538 = vmul.f32 -0.5, %v420
    %v539 = vadd.f32 %v538, 1.0
    %v540 = vmul.f32 %v539, %v420
    %v541 = vand.u32 2147483647, %v420
    %vm542 = vcmp.lt.f32.partialorder %v541, 0.0004427343
    %v543 = vsel %vm542, %v540, %v537
    %v544 = vadd.f32 %v422, 1.0
    %v545 = vlog2.pop %v544
    %v546 = vmul.f32 %v545, 0.6931472
    %v547 = vmul.f32 -0.5, %v422
    %v548 = vadd.f32 %v547, 1.0
    %v549 = vmul.f32 %v548, %v422
    %v550 = vand.u32 2147483647, %v422
    %vm551 = vcmp.lt.f32.partialorder %v550, 0.0004427343
    %v552 = vsel %vm551, %v549, %v546
    %v553 = vadd.f32 %v424, 1.0
    %v554 = vlog2.pop %v553
    %v555 = vmul.f32 %v554, 0.6931472
    %v556 = vmul.f32 -0.5, %v424
    %v557 = vadd.f32 %v556, 1.0
    %v558 = vmul.f32 %v557, %v424
    %v559 = vand.u32 2147483647, %v424
    %vm560 = vcmp.lt.f32.partialorder %v559, 0.0004427343
    %v561 = vsel %vm560, %v558, %v555
    %v562 = vadd.f32 %v426, 1.0
    %v563 = vlog2.pop %v562
    %v564 = vmul.f32 %v563, 0.6931472
    %v565 = vmul.f32 -0.5, %v426
    %v566 = vadd.f32 %v565, 1.0
    %v567 = vmul.f32 %v566, %v426
    %v568 = vand.u32 2147483647, %v426
    %vm569 = vcmp.lt.f32.partialorder %v568, 0.0004427343
    %v570 = vsel %vm569, %v567, %v564
    %v571 = vtanh.pop %v435
    %v572 = vtanh.pop %v444
    %v573 = vtanh.pop %v453
    %v574 = vtanh.pop %v462
    %v575 = vtanh.pop %v471
    %v576 = vtanh.pop %v480
    %v577 = vtanh.pop %v489
    %v578 = vtanh.pop %v498
    %v579 = vtanh.pop %v507
    %v580 = vtanh.pop %v516
    %v581 = vtanh.pop %v525
    %v582 = vtanh.pop %v534
    %v583 = vtanh.pop %v543
    %v584 = vtanh.pop %v552
    %v585 = vtanh.pop %v561
    %v586 = vtanh.pop %v570
    %v587 = vmul.f32 %v363, %v571
    %v588 = vmul.f32 %v364, %v572
    %v589 = vmul.f32 %v365, %v573
    %v590 = vmul.f32 %v366, %v574
    %v591 = vmul.f32 %v367, %v575
    %v592 = vmul.f32 %v368, %v576
    %v593 = vmul.f32 %v369, %v577
    %v594 = vmul.f32 %v370, %v578
    %v595 = vmul.f32 %v371, %v579
    %v596 = vmul.f32 %v372, %v580
    %v597 = vmul.f32 %v373, %v581
    %v598 = vmul.f32 %v374, %v582
    %v599 = vmul.f32 %v375, %v583
    %v600 = vmul.f32 %v376, %v584
    %v601 = vmul.f32 %v377, %v585
    %v602 = vmul.f32 %v378, %v586
    %v603 = vld [vmem:[%s4] sm:$0xf]
    %v604 = vld [vmem:[%s4 + $0x4] sm:$0xf]
    %v605 = vld [vmem:[%s4 + $0x8] sm:$0xf]
    %v606 = vld [vmem:[%s4 + $0xc] sm:$0xf]
    %v607 = vld [vmem:[%s4 + $0x10] sm:$0xf]
    %v608 = vld [vmem:[%s4 + $0x14] sm:$0xf]
    %v609 = vld [vmem:[%s4 + $0x18] sm:$0xf]
    %v610 = vld [vmem:[%s4 + $0x1c] sm:$0xf]
    %v611 = vld [vmem:[%s4 + $0x20] sm:$0xf]
    %v612 = vld [vmem:[%s4 + $0x24] sm:$0xf]
    %v613 = vld [vmem:[%s4 + $0x28] sm:$0xf]
    %v614 = vld [vmem:[%s4 + $0x2c] sm:$0xf]
    %v615 = vld [vmem:[%s4 + $0x30] sm:$0xf]
    %v616 = vld [vmem:[%s4 + $0x34] sm:$0xf]
    %v617 = vld [vmem:[%s4 + $0x38] sm:$0xf]
    %v618 = vld [vmem:[%s4 + $0x3c] sm:$0xf]
    %v619 = vunpack.c.l.bf16 %v603
    %v620 = vunpack.c.l.bf16 %v604
    %v621 = vunpack.c.l.bf16 %v605
    %v622 = vunpack.c.l.bf16 %v606
    %v623 = vunpack.c.l.bf16 %v607
    %v624 = vunpack.c.l.bf16 %v608
    %v625 = vunpack.c.l.bf16 %v609
    %v626 = vunpack.c.l.bf16 %v610
    %v627 = vunpack.c.l.bf16 %v611
    %v628 = vunpack.c.l.bf16 %v612
    %v629 = vunpack.c.l.bf16 %v613
    %v630 = vunpack.c.l.bf16 %v614
    %v631 = vunpack.c.l.bf16 %v615
    %v632 = vunpack.c.l.bf16 %v616
    %v633 = vunpack.c.l.bf16 %v617
    %v634 = vunpack.c.l.bf16 %v618
    %v635 = vadd.f32 %v587, %v619
    %v636 = vadd.f32 %v588, %v620
    %v637 = vadd.f32 %v589, %v621
    %v638 = vadd.f32 %v590, %v622
    %v639 = vadd.f32 %v591, %v623
    %v640 = vadd.f32 %v592, %v624
    %v641 = vadd.f32 %v593, %v625
    %v642 = vadd.f32 %v594, %v626
    %v643 = vadd.f32 %v595, %v627
    %v644 = vadd.f32 %v596, %v628
    %v645 = vadd.f32 %v597, %v629
    %v646 = vadd.f32 %v598, %v630
    %v647 = vadd.f32 %v599, %v631
    %v648 = vadd.f32 %v600, %v632
    %v649 = vadd.f32 %v601, %v633
    %v650 = vadd.f32 %v602, %v634
    %v651 = vpack.c.bf16 %v636, %v635
    %v652 = vpack.c.bf16 %v638, %v637
    %v653 = vpack.c.bf16 %v640, %v639
    %v654 = vpack.c.bf16 %v642, %v641
    %v655 = vpack.c.bf16 %v644, %v643
    %v656 = vpack.c.bf16 %v646, %v645
    %v657 = vpack.c.bf16 %v648, %v647
    %v658 = vpack.c.bf16 %v650, %v649
    %v667 = vunpack.c.l.b16 %v651
    %v668 = vunpack.c.h.b16 %v651
    %v669 = vunpack.c.l.b16 %v652
    %v670 = vunpack.c.h.b16 %v652
    %v671 = vunpack.c.l.b16 %v653
    %v672 = vunpack.c.h.b16 %v653
    %v673 = vunpack.c.l.b16 %v654
    %v674 = vunpack.c.h.b16 %v654
    %v675 = vunpack.c.l.b16 %v655
    %v676 = vunpack.c.h.b16 %v655
    %v677 = vunpack.c.l.b16 %v656
    %v678 = vunpack.c.h.b16 %v656
    %v679 = vunpack.c.l.b16 %v657
    %v680 = vunpack.c.h.b16 %v657
    %v681 = vunpack.c.l.b16 %v658
    %v682 = vunpack.c.h.b16 %v658
    %v683 = vpack.c.b16 %v667, %v667
    %v684 = vpack.c.b16 %v668, %v668
    %v685 = vpack.c.b16 %v669, %v669
    %v686 = vpack.c.b16 %v670, %v670
    %v687 = vpack.c.b16 %v671, %v671
    %v688 = vpack.c.b16 %v672, %v672
    %v689 = vpack.c.b16 %v673, %v673
    %v690 = vpack.c.b16 %v674, %v674
    %v691 = vpack.c.b16 %v675, %v675
    %v692 = vpack.c.b16 %v676, %v676
    %v693 = vpack.c.b16 %v677, %v677
    %v694 = vpack.c.b16 %v678, %v678
    %v695 = vpack.c.b16 %v679, %v679
    %v696 = vpack.c.b16 %v680, %v680
    %v697 = vpack.c.b16 %v681, %v681
    %v698 = vpack.c.b16 %v682, %v682
    %715 = vst [vmem:[%s5] sm:$0xf] %v683
    %716 = vst [vmem:[%s5 + $0x4] sm:$0xf] %v684
    %717 = vst [vmem:[%s5 + $0x8] sm:$0xf] %v685
    %718 = vst [vmem:[%s5 + $0xc] sm:$0xf] %v686
    %719 = vst [vmem:[%s5 + $0x10] sm:$0xf] %v687
    %720 = vst [vmem:[%s5 + $0x14] sm:$0xf] %v688
    %721 = vst [vmem:[%s5 + $0x18] sm:$0xf] %v689
    %722 = vst [vmem:[%s5 + $0x1c] sm:$0xf] %v690
    %723 = vst [vmem:[%s5 + $0x20] sm:$0xf] %v691
    %724 = vst [vmem:[%s5 + $0x24] sm:$0xf] %v692
    %725 = vst [vmem:[%s5 + $0x28] sm:$0xf] %v693
    %726 = vst [vmem:[%s5 + $0x2c] sm:$0xf] %v694
    %727 = vst [vmem:[%s5 + $0x30] sm:$0xf] %v695
    %728 = vst [vmem:[%s5 + $0x34] sm:$0xf] %v696
    %729 = vst [vmem:[%s5 + $0x38] sm:$0xf] %v697
    %730 = vst [vmem:[%s5 + $0x3c] sm:$0xf] %v698
  $region29: #{csp_first_stage.9} parent=0 // pred_fallthru
    _
  // Predicated region
  $region30: #{csp_first_stage.9} parent=0 // pred_check
    _
  $region31: #{csp_first_stage.9} parent=0 // pred_check_branch
    %732 = sbr.rel (0) target = $region33
  $region32: #{csp_first_stage.9} parent=0 // pred_region
    _
  $region33: #{csp_first_stage.9} parent=0 // pred_fallthru
    _
  // Predicated region
  $region34: #{csp_first_stage.9} parent=0 // pred_check
    _
  $region35: #{csp_first_stage.9} parent=0 // pred_check_branch
    %734 = sbr.rel (0) target = $region37
  $region36: #{csp_first_stage.9} parent=0 // pred_region
    _
  $region37: #{csp_first_stage.9} parent=0 // pred_fallthru
    _

// kernel: csp_first_stage.11
$region0: #{csp_first_stage.11}
  #allocation0 [shape = 'u32[]', space=smem, size = 0x4, offset = 0x4, fixed_abs, tag = 'smem constant byte address 0x4 - core index']
  #allocation1 [shape = 'u32[144,128]{1,0:T(1,128)}', space=vmem, size = 0x12000, scoped, tag = 'internal scratch']
  #allocation2 [shape = 'f32[128,128]{1,0:T(8,128)}', space=vmem, size = 0x10000, scoped, tag = 'scratch operand']
  %s0 = inlined_call_operand.vmem [shape: bf16[128,128], index: 0, kind: input, shape index: {}]
  %s1 = inlined_call_operand.vmem [shape: bf16[128,128], index: 1, kind: input, shape index: {}]
  %s2 = inlined_call_operand.vmem [shape: bf16[128,128], index: 2, kind: input, shape index: {}]
  %s3 = inlined_call_operand.vmem [shape: bf16[128,128], index: 3, kind: input, shape index: {}]
  %s4 = inlined_call_operand.vmem [shape: f32[1,128], index: 4, kind: input, shape index: {}]
  %s5 = inlined_call_operand.vmem [shape: f32[1,128], index: 5, kind: input, shape index: {}]
  %s6 = inlined_call_operand.hbm [shape: bf16[128,128], index: 6, kind: output, shape index: {}]
  %s7 = sld [smem:[#allocation0]]
  $region42: #{csp_first_stage.11} parent=0
    _
  %s9 = ssub.s32 1, %s7
  %s10 = scalar_select 0, %s9, %s7
  $region1: #{csp_first_stage.11} parent=0
    #allocation3 [shape = 'u8[32768]{0}', space=vmem, size = 0x8000, scoped, tag = 'output window, operand 0, single buffered']
    #allocation4 [shape = 's32[1]{0}', space=sflag, size = 0x4, scoped, tag = 'scoped memory for csp_first_stage.11']
    %11 = vsyncpa [#allocation4], 0
    // Predicated region
    $region2: #{csp_first_stage.11} parent=1 // pred_check
      _
    $region3: #{csp_first_stage.11} parent=1 // pred_check_branch
      %13 = sbr.rel (0) target = $region5
    $region4: #{csp_first_stage.11} parent=1 // pred_region
      _
    $region5: #{csp_first_stage.11} parent=1 // pred_fallthru
      _
    // Predicated region
    $region6: #{csp_first_stage.11} parent=1 // pred_check
      _
    $region7: #{csp_first_stage.11} parent=1 // pred_check_branch
      %15 = sbr.rel (0) target = $region9
    $region8: #{csp_first_stage.11} parent=1 // pred_region
      _
    $region9: #{csp_first_stage.11} parent=1 // pred_fallthru
      _
    // Predicated region
    $region10: #{csp_first_stage.11} parent=1 // pred_check
      _
    $region11: #{csp_first_stage.11} parent=1 // pred_check_branch
      %17 = sbr.rel (0) target = $region13
    $region12: #{csp_first_stage.11} parent=1 // pred_region
      _
    $region13: #{csp_first_stage.11} parent=1 // pred_fallthru
      _
    // Predicated region
    $region14: #{csp_first_stage.11} parent=1 // pred_check
      _
    $region15: #{csp_first_stage.11} parent=1 // pred_check_branch
      %19 = sbr.rel (0) target = $region17
    $region16: #{csp_first_stage.11} parent=1 // pred_region
      _
    $region17: #{csp_first_stage.11} parent=1 // pred_fallthru
      _
    // Predicated region
    $region18: #{csp_first_stage.11} parent=1 // pred_check
      _
    $region19: #{csp_first_stage.11} parent=1 // pred_check_branch
      %21 = sbr.rel (0) target = $region21
    $region20: #{csp_first_stage.11} parent=1 // pred_region
      _
    $region21: #{csp_first_stage.11} parent=1 // pred_fallthru
      _
    // Predicated region
    $region22: #{csp_first_stage.11} parent=1 // pred_check
      _
    $region23: #{csp_first_stage.11} parent=1 // pred_check_branch
      %23 = sbr.rel (0) target = $region25
    $region24: #{csp_first_stage.11} parent=1 // pred_region
      _
    $region25: #{csp_first_stage.11} parent=1 // pred_fallthru
      _
    %p25 = scmp.eq.s32.totalorder 0, 0
    // Predicated region
    $region26: #{csp_first_stage.11} parent=1 // pred_check
      %p26 = pneg %p25
    $region27: #{csp_first_stage.11} parent=1 // pred_check_branch
      %28 = sbr.rel (%p26) target = $region29
    $region28: #{csp_first_stage.11} parent=1 // pred_region
      %29 = vst [vmem:[#allocation2] sm:$0xff] 0.0
      %30 = vst [vmem:[#allocation2 + $0x8] sm:$0xff] 0.0
      %31 = vst [vmem:[#allocation2 + $0x10] sm:$0xff] 0.0
      %32 = vst [vmem:[#allocation2 + $0x18] sm:$0xff] 0.0
      %33 = vst [vmem:[#allocation2 + $0x20] sm:$0xff] 0.0
      %34 = vst [vmem:[#allocation2 + $0x28] sm:$0xff] 0.0
      %35 = vst [vmem:[#allocation2 + $0x30] sm:$0xff] 0.0
      %36 = vst [vmem:[#allocation2 + $0x38] sm:$0xff] 0.0
      %37 = vst [vmem:[#allocation2 + $0x40] sm:$0xff] 0.0
      %38 = vst [vmem:[#allocation2 + $0x48] sm:$0xff] 0.0
      %39 = vst [vmem:[#allocation2 + $0x50] sm:$0xff] 0.0
      %40 = vst [vmem:[#allocation2 + $0x58] sm:$0xff] 0.0
      %41 = vst [vmem:[#allocation2 + $0x60] sm:$0xff] 0.0
      %42 = vst [vmem:[#allocation2 + $0x68] sm:$0xff] 0.0
      %43 = vst [vmem:[#allocation2 + $0x70] sm:$0xff] 0.0
      %44 = vst [vmem:[#allocation2 + $0x78] sm:$0xff] 0.0
    $region29: #{csp_first_stage.11} parent=1 // pred_fallthru
      _
    %v45 = vld [vmem:[#allocation2] sm:$0xff]
    %v46 = vld [vmem:[#allocation2 + $0x8] sm:$0xff]
    %v47 = vld [vmem:[#allocation2 + $0x10] sm:$0xff]
    %v48 = vld [vmem:[#allocation2 + $0x18] sm:$0xff]
    %v49 = vld [vmem:[#allocation2 + $0x20] sm:$0xff]
    %v50 = vld [vmem:[#allocation2 + $0x28] sm:$0xff]
    %v51 = vld [vmem:[#allocation2 + $0x30] sm:$0xff]
    %v52 = vld [vmem:[#allocation2 + $0x38] sm:$0xff]
    %v53 = vld [vmem:[#allocation2 + $0x40] sm:$0xff]
    %v54 = vld [vmem:[#allocation2 + $0x48] sm:$0xff]
    %v55 = vld [vmem:[#allocation2 + $0x50] sm:$0xff]
    %v56 = vld [vmem:[#allocation2 + $0x58] sm:$0xff]
    %v57 = vld [vmem:[#allocation2 + $0x60] sm:$0xff]
    %v58 = vld [vmem:[#allocation2 + $0x68] sm:$0xff]
    %v59 = vld [vmem:[#allocation2 + $0x70] sm:$0xff]
    %v60 = vld [vmem:[#allocation2 + $0x78] sm:$0xff]
    %v61 = vld [vmem:[%s0] sm:$0xf]
    %v62 = vld [vmem:[%s0 + $0x4] sm:$0xf]
    %v63 = vld [vmem:[%s0 + $0x8] sm:$0xf]
    %v64 = vld [vmem:[%s0 + $0xc] sm:$0xf]
    %v65 = vld [vmem:[%s0 + $0x10] sm:$0xf]
    %v66 = vld [vmem:[%s0 + $0x14] sm:$0xf]
    %v67 = vld [vmem:[%s0 + $0x18] sm:$0xf]
    %v68 = vld [vmem:[%s0 + $0x1c] sm:$0xf]
    %v69 = vld [vmem:[%s0 + $0x20] sm:$0xf]
    %v70 = vld [vmem:[%s0 + $0x24] sm:$0xf]
    %v71 = vld [vmem:[%s0 + $0x28] sm:$0xf]
    %v72 = vld [vmem:[%s0 + $0x2c] sm:$0xf]
    %v73 = vld [vmem:[%s0 + $0x30] sm:$0xf]
    %v74 = vld [vmem:[%s0 + $0x34] sm:$0xf]
    %v75 = vld [vmem:[%s0 + $0x38] sm:$0xf]
    %v76 = vld [vmem:[%s0 + $0x3c] sm:$0xf]
    %v77 = vld [vmem:[%s2] sm:$0xf]
    %v78 = vld [vmem:[%s2 + $0x4] sm:$0xf]
    %v79 = vld [vmem:[%s2 + $0x8] sm:$0xf]
    %v80 = vld [vmem:[%s2 + $0xc] sm:$0xf]
    %v81 = vld [vmem:[%s2 + $0x10] sm:$0xf]
    %v82 = vld [vmem:[%s2 + $0x14] sm:$0xf]
    %v83 = vld [vmem:[%s2 + $0x18] sm:$0xf]
    %v84 = vld [vmem:[%s2 + $0x1c] sm:$0xf]
    %v85 = vld [vmem:[%s2 + $0x20] sm:$0xf]
    %v86 = vld [vmem:[%s2 + $0x24] sm:$0xf]
    %v87 = vld [vmem:[%s2 + $0x28] sm:$0xf]
    %v88 = vld [vmem:[%s2 + $0x2c] sm:$0xf]
    %v89 = vld [vmem:[%s2 + $0x30] sm:$0xf]
    %v90 = vld [vmem:[%s2 + $0x34] sm:$0xf]
    %v91 = vld [vmem:[%s2 + $0x38] sm:$0xf]
    %v92 = vld [vmem:[%s2 + $0x3c] sm:$0xf]
    %v109 = vunpack.c.l.b16 %v61
    %v110 = vunpack.c.l.b16 %v62
    %v111 = vunpack.c.l.b16 %v63
    %v112 = vunpack.c.l.b16 %v64
    %v113 = vunpack.c.l.b16 %v65
    %v114 = vunpack.c.l.b16 %v66
    %v115 = vunpack.c.l.b16 %v67
    %v116 = vunpack.c.l.b16 %v68
    %v117 = vunpack.c.l.b16 %v69
    %v118 = vunpack.c.l.b16 %v70
    %v119 = vunpack.c.l.b16 %v71
    %v120 = vunpack.c.l.b16 %v72
    %v121 = vunpack.c.l.b16 %v73
    %v122 = vunpack.c.l.b16 %v74
    %v123 = vunpack.c.l.b16 %v75
    %v124 = vunpack.c.l.b16 %v76
    %v125 = vpack.c.b16 %v110, %v109
    %v126 = vpack.c.b16 %v112, %v111
    %v127 = vpack.c.b16 %v114, %v113
    %v128 = vpack.c.b16 %v116, %v115
    %v129 = vpack.c.b16 %v118, %v117
    %v130 = vpack.c.b16 %v120, %v119
    %v131 = vpack.c.b16 %v122, %v121
    %v132 = vpack.c.b16 %v124, %v123
    %v157 = vunpack.c.l.b16 %v77
    %v158 = vunpack.c.l.b16 %v78
    %v159 = vunpack.c.l.b16 %v79
    %v160 = vunpack.c.l.b16 %v80
    %v161 = vunpack.c.l.b16 %v81
    %v162 = vunpack.c.l.b16 %v82
    %v163 = vunpack.c.l.b16 %v83
    %v164 = vunpack.c.l.b16 %v84
    %v165 = vunpack.c.l.b16 %v85
    %v166 = vunpack.c.l.b16 %v86
    %v167 = vunpack.c.l.b16 %v87
    %v168 = vunpack.c.l.b16 %v88
    %v169 = vunpack.c.l.b16 %v89
    %v170 = vunpack.c.l.b16 %v90
    %v171 = vunpack.c.l.b16 %v91
    %v172 = vunpack.c.l.b16 %v92
    %v173 = vpack.c.b16 %v158, %v157
    %v174 = vpack.c.b16 %v160, %v159
    %v175 = vpack.c.b16 %v162, %v161
    %v176 = vpack.c.b16 %v164, %v163
    %v177 = vpack.c.b16 %v166, %v165
    %v178 = vpack.c.b16 %v168, %v167
    %v179 = vpack.c.b16 %v170, %v169
    %v180 = vpack.c.b16 %v172, %v171
    %189 = vmatprep.subr.bf16.mxu0 0
    %190 = vmatpush1.bf16.msra.mxu0 %v180
    %191 = vmatprep.subr.bf16.mxu0 0
    %192 = vmatpush1.bf16.msra.mxu0 %v179
    %193 = vmatprep.subr.bf16.mxu0 0
    %194 = vmatpush1.bf16.msra.mxu0 %v178
    %195 = vmatprep.subr.bf16.mxu0 0
    %196 = vmatpush1.bf16.msra.mxu0 %v177
    %197 = vmatprep.subr.bf16.mxu0 0
    %198 = vmatpush1.bf16.msra.mxu0 %v176
    %199 = vmatprep.subr.bf16.mxu0 0
    %200 = vmatpush1.bf16.msra.mxu0 %v175
    %201 = vmatprep.subr.bf16.mxu0 0
    %202 = vmatpush1.bf16.msra.mxu0 %v174
    %203 = vmatprep.subr.bf16.mxu0 0
    %204 = vmatpush1.bf16.msra.mxu0 %v173
    %205 = vmatprep.subr.bf16.mxu0 0
    %206 = vmatpush2.bf16.msra.mxu0 0
    %207 = vmatprep.subr.bf16.mxu0 0
    %208 = vmatpush2.bf16.msra.mxu0 0
    %209 = vmatprep.subr.bf16.mxu0 0
    %210 = vmatpush2.bf16.msra.mxu0 0
    %211 = vmatprep.subr.bf16.mxu0 0
    %212 = vmatpush2.bf16.msra.mxu0 0
    %213 = vmatprep.subr.bf16.mxu0 0
    %214 = vmatpush2.bf16.msra.mxu0 0
    %215 = vmatprep.subr.bf16.mxu0 0
    %216 = vmatpush2.bf16.msra.mxu0 0
    %217 = vmatprep.subr.bf16.mxu0 0
    %218 = vmatpush2.bf16.msra.mxu0 0
    %219 = vmatprep.subr.bf16.mxu0 0
    %220 = vmatpush2.bf16.msra.mxu0 0
    %221 = vmatprep.mubr.bf16.mxu0 0
    %222 = vmatmul.mubr.bf16.gmra.mxu0 %v125
    %v223 = vpop.f32.mrf.mxu0
    %v224 = vadd.f32 0.0, %v223
    %v225 = vpop.f32.mrf.mxu0
    %v226 = vpop.f32.mrf.mxu0
    %v227 = vadd.f32 0.0, %v226
    %v228 = vpop.f32.mrf.mxu0
    %229 = vmatprep.mubr.bf16.mxu0 0
    %230 = vmatmul.mubr.bf16.gmra.mxu0 %v126
    %v231 = vpop.f32.mrf.mxu0
    %v232 = vadd.f32 0.0, %v231
    %v233 = vpop.f32.mrf.mxu0
    %v234 = vpop.f32.mrf.mxu0
    %v235 = vadd.f32 0.0, %v234
    %v236 = vpop.f32.mrf.mxu0
    %237 = vmatprep.mubr.bf16.mxu0 0
    %238 = vmatmul.mubr.bf16.gmra.mxu0 %v127
    %v239 = vpop.f32.mrf.mxu0
    %v240 = vadd.f32 0.0, %v239
    %v241 = vpop.f32.mrf.mxu0
    %v242 = vpop.f32.mrf.mxu0
    %v243 = vadd.f32 0.0, %v242
    %v244 = vpop.f32.mrf.mxu0
    %245 = vmatprep.mubr.bf16.mxu0 0
    %246 = vmatmul.mubr.bf16.gmra.mxu0 %v128
    %v247 = vpop.f32.mrf.mxu0
    %v248 = vadd.f32 0.0, %v247
    %v249 = vpop.f32.mrf.mxu0
    %v250 = vpop.f32.mrf.mxu0
    %v251 = vadd.f32 0.0, %v250
    %v252 = vpop.f32.mrf.mxu0
    %253 = vmatprep.mubr.bf16.mxu0 0
    %254 = vmatmul.mubr.bf16.gmra.mxu0 %v129
    %v255 = vpop.f32.mrf.mxu0
    %v256 = vadd.f32 0.0, %v255
    %v257 = vpop.f32.mrf.mxu0
    %v258 = vpop.f32.mrf.mxu0
    %v259 = vadd.f32 0.0, %v258
    %v260 = vpop.f32.mrf.mxu0
    %261 = vmatprep.mubr.bf16.mxu0 0
    %262 = vmatmul.mubr.bf16.gmra.mxu0 %v130
    %v263 = vpop.f32.mrf.mxu0
    %v264 = vadd.f32 0.0, %v263
    %v265 = vpop.f32.mrf.mxu0
    %v266 = vpop.f32.mrf.mxu0
    %v267 = vadd.f32 0.0, %v266
    %v268 = vpop.f32.mrf.mxu0
    %269 = vmatprep.mubr.bf16.mxu0 0
    %270 = vmatmul.mubr.bf16.gmra.mxu0 %v131
    %v271 = vpop.f32.mrf.mxu0
    %v272 = vadd.f32 0.0, %v271
    %v273 = vpop.f32.mrf.mxu0
    %v274 = vpop.f32.mrf.mxu0
    %v275 = vadd.f32 0.0, %v274
    %v276 = vpop.f32.mrf.mxu0
    %277 = vmatprep.mubr.bf16.mxu0 0
    %278 = vmatmul.mubr.bf16.gmra.mxu0 %v132
    %v279 = vpop.f32.mrf.mxu0
    %v280 = vadd.f32 0.0, %v279
    %v281 = vpop.f32.mrf.mxu0
    %v282 = vpop.f32.mrf.mxu0
    %v283 = vadd.f32 0.0, %v282
    %v284 = vpop.f32.mrf.mxu0
    %285 = vdwg.mxu0
    %v286 = vadd.f32 %v45, %v224
    %v287 = vadd.f32 %v46, %v227
    %v288 = vadd.f32 %v47, %v232
    %v289 = vadd.f32 %v48, %v235
    %v290 = vadd.f32 %v49, %v240
    %v291 = vadd.f32 %v50, %v243
    %v292 = vadd.f32 %v51, %v248
    %v293 = vadd.f32 %v52, %v251
    %v294 = vadd.f32 %v53, %v256
    %v295 = vadd.f32 %v54, %v259
    %v296 = vadd.f32 %v55, %v264
    %v297 = vadd.f32 %v56, %v267
    %v298 = vadd.f32 %v57, %v272
    %v299 = vadd.f32 %v58, %v275
    %v300 = vadd.f32 %v59, %v280
    %v301 = vadd.f32 %v60, %v283
    %v302 = vld [vmem:[%s1] sm:$0xf]
    %v303 = vld [vmem:[%s1 + $0x4] sm:$0xf]
    %v304 = vld [vmem:[%s1 + $0x8] sm:$0xf]
    %v305 = vld [vmem:[%s1 + $0xc] sm:$0xf]
    %v306 = vld [vmem:[%s1 + $0x10] sm:$0xf]
    %v307 = vld [vmem:[%s1 + $0x14] sm:$0xf]
    %v308 = vld [vmem:[%s1 + $0x18] sm:$0xf]
    %v309 = vld [vmem:[%s1 + $0x1c] sm:$0xf]
    %v310 = vld [vmem:[%s1 + $0x20] sm:$0xf]
    %v311 = vld [vmem:[%s1 + $0x24] sm:$0xf]
    %v312 = vld [vmem:[%s1 + $0x28] sm:$0xf]
    %v313 = vld [vmem:[%s1 + $0x2c] sm:$0xf]
    %v314 = vld [vmem:[%s1 + $0x30] sm:$0xf]
    %v315 = vld [vmem:[%s1 + $0x34] sm:$0xf]
    %v316 = vld [vmem:[%s1 + $0x38] sm:$0xf]
    %v317 = vld [vmem:[%s1 + $0x3c] sm:$0xf]
    %v318 = vld [vmem:[%s3] sm:$0xf]
    %v319 = vld [vmem:[%s3 + $0x4] sm:$0xf]
    %v320 = vld [vmem:[%s3 + $0x8] sm:$0xf]
    %v321 = vld [vmem:[%s3 + $0xc] sm:$0xf]
    %v322 = vld [vmem:[%s3 + $0x10] sm:$0xf]
    %v323 = vld [vmem:[%s3 + $0x14] sm:$0xf]
    %v324 = vld [vmem:[%s3 + $0x18] sm:$0xf]
    %v325 = vld [vmem:[%s3 + $0x1c] sm:$0xf]
    %v326 = vld [vmem:[%s3 + $0x20] sm:$0xf]
    %v327 = vld [vmem:[%s3 + $0x24] sm:$0xf]
    %v328 = vld [vmem:[%s3 + $0x28] sm:$0xf]
    %v329 = vld [vmem:[%s3 + $0x2c] sm:$0xf]
    %v330 = vld [vmem:[%s3 + $0x30] sm:$0xf]
    %v331 = vld [vmem:[%s3 + $0x34] sm:$0xf]
    %v332 = vld [vmem:[%s3 + $0x38] sm:$0xf]
    %v333 = vld [vmem:[%s3 + $0x3c] sm:$0xf]
    %v350 = vunpack.c.l.b16 %v302
    %v351 = vunpack.c.l.b16 %v303
    %v352 = vunpack.c.l.b16 %v304
    %v353 = vunpack.c.l.b16 %v305
    %v354 = vunpack.c.l.b16 %v306
    %v355 = vunpack.c.l.b16 %v307
    %v356 = vunpack.c.l.b16 %v308
    %v357 = vunpack.c.l.b16 %v309
    %v358 = vunpack.c.l.b16 %v310
    %v359 = vunpack.c.l.b16 %v311
    %v360 = vunpack.c.l.b16 %v312
    %v361 = vunpack.c.l.b16 %v313
    %v362 = vunpack.c.l.b16 %v314
    %v363 = vunpack.c.l.b16 %v315
    %v364 = vunpack.c.l.b16 %v316
    %v365 = vunpack.c.l.b16 %v317
    %v366 = vpack.c.b16 %v351, %v350
    %v367 = vpack.c.b16 %v353, %v352
    %v368 = vpack.c.b16 %v355, %v354
    %v369 = vpack.c.b16 %v357, %v356
    %v370 = vpack.c.b16 %v359, %v358
    %v371 = vpack.c.b16 %v361, %v360
    %v372 = vpack.c.b16 %v363, %v362
    %v373 = vpack.c.b16 %v365, %v364
    %v398 = vunpack.c.l.b16 %v318
    %v399 = vunpack.c.l.b16 %v319
    %v400 = vunpack.c.l.b16 %v320
    %v401 = vunpack.c.l.b16 %v321
    %v402 = vunpack.c.l.b16 %v322
    %v403 = vunpack.c.l.b16 %v323
    %v404 = vunpack.c.l.b16 %v324
    %v405 = vunpack.c.l.b16 %v325
    %v406 = vunpack.c.l.b16 %v326
    %v407 = vunpack.c.l.b16 %v327
    %v408 = vunpack.c.l.b16 %v328
    %v409 = vunpack.c.l.b16 %v329
    %v410 = vunpack.c.l.b16 %v330
    %v411 = vunpack.c.l.b16 %v331
    %v412 = vunpack.c.l.b16 %v332
    %v413 = vunpack.c.l.b16 %v333
    %v414 = vpack.c.b16 %v399, %v398
    %v415 = vpack.c.b16 %v401, %v400
    %v416 = vpack.c.b16 %v403, %v402
    %v417 = vpack.c.b16 %v405, %v404
    %v418 = vpack.c.b16 %v407, %v406
    %v419 = vpack.c.b16 %v409, %v408
    %v420 = vpack.c.b16 %v411, %v410
    %v421 = vpack.c.b16 %v413, %v412
    %430 = vmatprep.subr.bf16.mxu0 0
    %431 = vmatpush1.bf16.msra.mxu0 %v421
    %432 = vmatprep.subr.bf16.mxu0 0
    %433 = vmatpush1.bf16.msra.mxu0 %v420
    %434 = vmatprep.subr.bf16.mxu0 0
    %435 = vmatpush1.bf16.msra.mxu0 %v419
    %436 = vmatprep.subr.bf16.mxu0 0
    %437 = vmatpush1.bf16.msra.mxu0 %v418
    %438 = vmatprep.subr.bf16.mxu0 0
    %439 = vmatpush1.bf16.msra.mxu0 %v417
    %440 = vmatprep.subr.bf16.mxu0 0
    %441 = vmatpush1.bf16.msra.mxu0 %v416
    %442 = vmatprep.subr.bf16.mxu0 0
    %443 = vmatpush1.bf16.msra.mxu0 %v415
    %444 = vmatprep.subr.bf16.mxu0 0
    %445 = vmatpush1.bf16.msra.mxu0 %v414
    %446 = vmatprep.subr.bf16.mxu0 0
    %447 = vmatpush2.bf16.msra.mxu0 0
    %448 = vmatprep.subr.bf16.mxu0 0
    %449 = vmatpush2.bf16.msra.mxu0 0
    %450 = vmatprep.subr.bf16.mxu0 0
    %451 = vmatpush2.bf16.msra.mxu0 0
    %452 = vmatprep.subr.bf16.mxu0 0
    %453 = vmatpush2.bf16.msra.mxu0 0
    %454 = vmatprep.subr.bf16.mxu0 0
    %455 = vmatpush2.bf16.msra.mxu0 0
    %456 = vmatprep.subr.bf16.mxu0 0
    %457 = vmatpush2.bf16.msra.mxu0 0
    %458 = vmatprep.subr.bf16.mxu0 0
    %459 = vmatpush2.bf16.msra.mxu0 0
    %460 = vmatprep.subr.bf16.mxu0 0
    %461 = vmatpush2.bf16.msra.mxu0 0
    %462 = vmatprep.mubr.bf16.mxu0 0
    %463 = vmatmul.mubr.bf16.gmra.mxu0 %v366
    %v464 = vpop.f32.mrf.mxu0
    %v465 = vadd.f32 0.0, %v464
    %v466 = vpop.f32.mrf.mxu0
    %v467 = vpop.f32.mrf.mxu0
    %v468 = vadd.f32 0.0, %v467
    %v469 = vpop.f32.mrf.mxu0
    %470 = vmatprep.mubr.bf16.mxu0 0
    %471 = vmatmul.mubr.bf16.gmra.mxu0 %v367
    %v472 = vpop.f32.mrf.mxu0
    %v473 = vadd.f32 0.0, %v472
    %v474 = vpop.f32.mrf.mxu0
    %v475 = vpop.f32.mrf.mxu0
    %v476 = vadd.f32 0.0, %v475
    %v477 = vpop.f32.mrf.mxu0
    %478 = vmatprep.mubr.bf16.mxu0 0
    %479 = vmatmul.mubr.bf16.gmra.mxu0 %v368
    %v480 = vpop.f32.mrf.mxu0
    %v481 = vadd.f32 0.0, %v480
    %v482 = vpop.f32.mrf.mxu0
    %v483 = vpop.f32.mrf.mxu0
    %v484 = vadd.f32 0.0, %v483
    %v485 = vpop.f32.mrf.mxu0
    %486 = vmatprep.mubr.bf16.mxu0 0
    %487 = vmatmul.mubr.bf16.gmra.mxu0 %v369
    %v488 = vpop.f32.mrf.mxu0
    %v489 = vadd.f32 0.0, %v488
    %v490 = vpop.f32.mrf.mxu0
    %v491 = vpop.f32.mrf.mxu0
    %v492 = vadd.f32 0.0, %v491
    %v493 = vpop.f32.mrf.mxu0
    %494 = vmatprep.mubr.bf16.mxu0 0
    %495 = vmatmul.mubr.bf16.gmra.mxu0 %v370
    %v496 = vpop.f32.mrf.mxu0
    %v497 = vadd.f32 0.0, %v496
    %v498 = vpop.f32.mrf.mxu0
    %v499 = vpop.f32.mrf.mxu0
    %v500 = vadd.f32 0.0, %v499
    %v501 = vpop.f32.mrf.mxu0
    %502 = vmatprep.mubr.bf16.mxu0 0
    %503 = vmatmul.mubr.bf16.gmra.mxu0 %v371
    %v504 = vpop.f32.mrf.mxu0
    %v505 = vadd.f32 0.0, %v504
    %v506 = vpop.f32.mrf.mxu0
    %v507 = vpop.f32.mrf.mxu0
    %v508 = vadd.f32 0.0, %v507
    %v509 = vpop.f32.mrf.mxu0
    %510 = vmatprep.mubr.bf16.mxu0 0
    %511 = vmatmul.mubr.bf16.gmra.mxu0 %v372
    %v512 = vpop.f32.mrf.mxu0
    %v513 = vadd.f32 0.0, %v512
    %v514 = vpop.f32.mrf.mxu0
    %v515 = vpop.f32.mrf.mxu0
    %v516 = vadd.f32 0.0, %v515
    %v517 = vpop.f32.mrf.mxu0
    %518 = vmatprep.mubr.bf16.mxu0 0
    %519 = vmatmul.mubr.bf16.gmra.mxu0 %v373
    %v520 = vpop.f32.mrf.mxu0
    %v521 = vadd.f32 0.0, %v520
    %v522 = vpop.f32.mrf.mxu0
    %v523 = vpop.f32.mrf.mxu0
    %v524 = vadd.f32 0.0, %v523
    %v525 = vpop.f32.mrf.mxu0
    %526 = vdwg.mxu0
    %v527 = vadd.f32 %v286, %v465
    %v528 = vadd.f32 %v287, %v468
    %v529 = vadd.f32 %v288, %v473
    %v530 = vadd.f32 %v289, %v476
    %v531 = vadd.f32 %v290, %v481
    %v532 = vadd.f32 %v291, %v484
    %v533 = vadd.f32 %v292, %v489
    %v534 = vadd.f32 %v293, %v492
    %v535 = vadd.f32 %v294, %v497
    %v536 = vadd.f32 %v295, %v500
    %v537 = vadd.f32 %v296, %v505
    %v538 = vadd.f32 %v297, %v508
    %v539 = vadd.f32 %v298, %v513
    %v540 = vadd.f32 %v299, %v516
    %v541 = vadd.f32 %v300, %v521
    %v542 = vadd.f32 %v301, %v524
    %543 = vst [vmem:[#allocation2] sm:$0xff] %v527
    %544 = vst [vmem:[#allocation2 + $0x8] sm:$0xff] %v528
    %545 = vst [vmem:[#allocation2 + $0x10] sm:$0xff] %v529
    %546 = vst [vmem:[#allocation2 + $0x18] sm:$0xff] %v530
    %547 = vst [vmem:[#allocation2 + $0x20] sm:$0xff] %v531
    %548 = vst [vmem:[#allocation2 + $0x28] sm:$0xff] %v532
    %549 = vst [vmem:[#allocation2 + $0x30] sm:$0xff] %v533
    %550 = vst [vmem:[#allocation2 + $0x38] sm:$0xff] %v534
    %551 = vst [vmem:[#allocation2 + $0x40] sm:$0xff] %v535
    %552 = vst [vmem:[#allocation2 + $0x48] sm:$0xff] %v536
    %553 = vst [vmem:[#allocation2 + $0x50] sm:$0xff] %v537
    %554 = vst [vmem:[#allocation2 + $0x58] sm:$0xff] %v538
    %555 = vst [vmem:[#allocation2 + $0x60] sm:$0xff] %v539
    %556 = vst [vmem:[#allocation2 + $0x68] sm:$0xff] %v540
    %557 = vst [vmem:[#allocation2 + $0x70] sm:$0xff] %v541
    %558 = vst [vmem:[#allocation2 + $0x78] sm:$0xff] %v542
    // Predicated region
    $region30: #{csp_first_stage.11} parent=1 // pred_check
      %p559 = pneg %p25
    $region31: #{csp_first_stage.11} parent=1 // pred_check_branch
      %561 = sbr.rel (%p559) target = $region33
    $region32: #{csp_first_stage.11} parent=1 // pred_region
      %v562 = vld [vmem:[#allocation2] sm:$0xff]
      %v563 = vld [vmem:[#allocation2 + $0x8] sm:$0xff]
      %v564 = vld [vmem:[#allocation2 + $0x10] sm:$0xff]
      %v565 = vld [vmem:[#allocation2 + $0x18] sm:$0xff]
      %v566 = vld [vmem:[#allocation2 + $0x20] sm:$0xff]
      %v567 = vld [vmem:[#allocation2 + $0x28] sm:$0xff]
      %v568 = vld [vmem:[#allocation2 + $0x30] sm:$0xff]
      %v569 = vld [vmem:[#allocation2 + $0x38] sm:$0xff]
      %v570 = vld [vmem:[#allocation2 + $0x40] sm:$0xff]
      %v571 = vld [vmem:[#allocation2 + $0x48] sm:$0xff]
      %v572 = vld [vmem:[#allocation2 + $0x50] sm:$0xff]
      %v573 = vld [vmem:[#allocation2 + $0x58] sm:$0xff]
      %v574 = vld [vmem:[#allocation2 + $0x60] sm:$0xff]
      %v575 = vld [vmem:[#allocation2 + $0x68] sm:$0xff]
      %v576 = vld [vmem:[#allocation2 + $0x70] sm:$0xff]
      %v577 = vld [vmem:[#allocation2 + $0x78] sm:$0xff]
      %v578 = vld [vmem:[%s4] sm:$0x1]
      %v580 = vlaneseq
      %v581 = vshrl.u32 %v580, 7
      %v582 = vsub.s32 0, %v581
      %v583 = vrot.slane %v578, %v582
      %v585 = vmul.f32 %v562, %v583
      %v586 = vmul.f32 %v563, %v583
      %v587 = vmul.f32 %v564, %v583
      %v588 = vmul.f32 %v565, %v583
      %v589 = vmul.f32 %v566, %v583
      %v590 = vmul.f32 %v567, %v583
      %v591 = vmul.f32 %v568, %v583
      %v592 = vmul.f32 %v569, %v583
      %v593 = vmul.f32 %v570, %v583
      %v594 = vmul.f32 %v571, %v583
      %v595 = vmul.f32 %v572, %v583
      %v596 = vmul.f32 %v573, %v583
      %v597 = vmul.f32 %v574, %v583
      %v598 = vmul.f32 %v575, %v583
      %v599 = vmul.f32 %v576, %v583
      %v600 = vmul.f32 %v577, %v583
      %v601 = vld [vmem:[%s5] sm:$0x1]
      %v603 = vlaneseq
      %v604 = vshrl.u32 %v603, 7
      %v605 = vsub.s32 0, %v604
      %v606 = vrot.slane %v601, %v605
      %v608 = vadd.f32 %v585, %v606
      %v609 = vadd.f32 %v586, %v606
      %v610 = vadd.f32 %v587, %v606
      %v611 = vadd.f32 %v588, %v606
      %v612 = vadd.f32 %v589, %v606
      %v613 = vadd.f32 %v590, %v606
      %v614 = vadd.f32 %v591, %v606
      %v615 = vadd.f32 %v592, %v606
      %v616 = vadd.f32 %v593, %v606
      %v617 = vadd.f32 %v594, %v606
      %v618 = vadd.f32 %v595, %v606
      %v619 = vadd.f32 %v596, %v606
      %v620 = vadd.f32 %v597, %v606
      %v621 = vadd.f32 %v598, %v606
      %v622 = vadd.f32 %v599, %v606
      %v623 = vadd.f32 %v600, %v606
      %v624 = vmin.f32 %v608, 20.0
      %v625 = vmin.f32 %v609, 20.0
      %v626 = vmin.f32 %v610, 20.0
      %v627 = vmin.f32 %v611, 20.0
      %v628 = vmin.f32 %v612, 20.0
      %v629 = vmin.f32 %v613, 20.0
      %v630 = vmin.f32 %v614, 20.0
      %v631 = vmin.f32 %v615, 20.0
      %v632 = vmin.f32 %v616, 20.0
      %v633 = vmin.f32 %v617, 20.0
      %v634 = vmin.f32 %v618, 20.0
      %v635 = vmin.f32 %v619, 20.0
      %v636 = vmin.f32 %v620, 20.0
      %v637 = vmin.f32 %v621, 20.0
      %v638 = vmin.f32 %v622, 20.0
      %v639 = vmin.f32 %v623, 20.0
      %v640 = vmul.f32 %v624, 1.442695
      %v641 = vpow.pop %v640
      %v642 = vmul.f32 %v625, 1.442695
      %v643 = vpow.pop %v642
      %v644 = vmul.f32 %v626, 1.442695
      %v645 = vpow.pop %v644
      %v646 = vmul.f32 %v627, 1.442695
      %v647 = vpow.pop %v646
      %v648 = vmul.f32 %v628, 1.442695
      %v649 = vpow.pop %v648
      %v650 = vmul.f32 %v629, 1.442695
      %v651 = vpow.pop %v650
      %v652 = vmul.f32 %v630, 1.442695
      %v653 = vpow.pop %v652
      %v654 = vmul.f32 %v631, 1.442695
      %v655 = vpow.pop %v654
      %v656 = vmul.f32 %v632, 1.442695
      %v657 = vpow.pop %v656
      %v658 = vmul.f32 %v633, 1.442695
      %v659 = vpow.pop %v658
      %v660 = vmul.f32 %v634, 1.442695
      %v661 = vpow.pop %v660
      %v662 = vmul.f32 %v635, 1.442695
      %v663 = vpow.pop %v662
      %v664 = vmul.f32 %v636, 1.442695
      %v665 = vpow.pop %v664
      %v666 = vmul.f32 %v637, 1.442695
      %v667 = vpow.pop %v666
      %v668 = vmul.f32 %v638, 1.442695
      %v669 = vpow.pop %v668
      %v670 = vmul.f32 %v639, 1.442695
      %v671 = vpow.pop %v670
      %v672 = vadd.f32 %v641, 1.0
      %v673 = vlog2.pop %v672
      %v674 = vmul.f32 %v673, 0.6931472
      %v675 = vmul.f32 -0.5, %v641
      %v676 = vadd.f32 %v675, 1.0
      %v677 = vmul.f32 %v676, %v641
      %v678 = vand.u32 2147483647, %v641
      %vm679 = vcmp.lt.f32.partialorder %v678, 0.0004427343
      %v680 = vsel %vm679, %v677, %v674
      %v681 = vadd.f32 %v643, 1.0
      %v682 = vlog2.pop %v681
      %v683 = vmul.f32 %v682, 0.6931472
      %v684 = vmul.f32 -0.5, %v643
      %v685 = vadd.f32 %v684, 1.0
      %v686 = vmul.f32 %v685, %v643
      %v687 = vand.u32 2147483647, %v643
      %vm688 = vcmp.lt.f32.partialorder %v687, 0.0004427343
      %v689 = vsel %vm688, %v686, %v683
      %v690 = vadd.f32 %v645, 1.0
      %v691 = vlog2.pop %v690
      %v692 = vmul.f32 %v691, 0.6931472
      %v693 = vmul.f32 -0.5, %v645
      %v694 = vadd.f32 %v693, 1.0
      %v695 = vmul.f32 %v694, %v645
      %v696 = vand.u32 2147483647, %v645
      %vm697 = vcmp.lt.f32.partialorder %v696, 0.0004427343
      %v698 = vsel %vm697, %v695, %v692
      %v699 = vadd.f32 %v647, 1.0
      %v700 = vlog2.pop %v699
      %v701 = vmul.f32 %v700, 0.6931472
      %v702 = vmul.f32 -0.5, %v647
      %v703 = vadd.f32 %v702, 1.0
      %v704 = vmul.f32 %v703, %v647
      %v705 = vand.u32 2147483647, %v647
      %vm706 = vcmp.lt.f32.partialorder %v705, 0.0004427343
      %v707 = vsel %vm706, %v704, %v701
      %v708 = vadd.f32 %v649, 1.0
      %v709 = vlog2.pop %v708
      %v710 = vmul.f32 %v709, 0.6931472
      %v711 = vmul.f32 -0.5, %v649
      %v712 = vadd.f32 %v711, 1.0
      %v713 = vmul.f32 %v712, %v649
      %v714 = vand.u32 2147483647, %v649
      %vm715 = vcmp.lt.f32.partialorder %v714, 0.0004427343
      %v716 = vsel %vm715, %v713, %v710
      %v717 = vadd.f32 %v651, 1.0
      %v718 = vlog2.pop %v717
      %v719 = vmul.f32 %v718, 0.6931472
      %v720 = vmul.f32 -0.5, %v651
      %v721 = vadd.f32 %v720, 1.0
      %v722 = vmul.f32 %v721, %v651
      %v723 = vand.u32 2147483647, %v651
      %vm724 = vcmp.lt.f32.partialorder %v723, 0.0004427343
      %v725 = vsel %vm724, %v722, %v719
      %v726 = vadd.f32 %v653, 1.0
      %v727 = vlog2.pop %v726
      %v728 = vmul.f32 %v727, 0.6931472
      %v729 = vmul.f32 -0.5, %v653
      %v730 = vadd.f32 %v729, 1.0
      %v731 = vmul.f32 %v730, %v653
      %v732 = vand.u32 2147483647, %v653
      %vm733 = vcmp.lt.f32.partialorder %v732, 0.0004427343
      %v734 = vsel %vm733, %v731, %v728
      %v735 = vadd.f32 %v655, 1.0
      %v736 = vlog2.pop %v735
      %v737 = vmul.f32 %v736, 0.6931472
      %v738 = vmul.f32 -0.5, %v655
      %v739 = vadd.f32 %v738, 1.0
      %v740 = vmul.f32 %v739, %v655
      %v741 = vand.u32 2147483647, %v655
      %vm742 = vcmp.lt.f32.partialorder %v741, 0.0004427343
      %v743 = vsel %vm742, %v740, %v737
      %v744 = vadd.f32 %v657, 1.0
      %v745 = vlog2.pop %v744
      %v746 = vmul.f32 %v745, 0.6931472
      %v747 = vmul.f32 -0.5, %v657
      %v748 = vadd.f32 %v747, 1.0
      %v749 = vmul.f32 %v748, %v657
      %v750 = vand.u32 2147483647, %v657
      %vm751 = vcmp.lt.f32.partialorder %v750, 0.0004427343
      %v752 = vsel %vm751, %v749, %v746
      %v753 = vadd.f32 %v659, 1.0
      %v754 = vlog2.pop %v753
      %v755 = vmul.f32 %v754, 0.6931472
      %v756 = vmul.f32 -0.5, %v659
      %v757 = vadd.f32 %v756, 1.0
      %v758 = vmul.f32 %v757, %v659
      %v759 = vand.u32 2147483647, %v659
      %vm760 = vcmp.lt.f32.partialorder %v759, 0.0004427343
      %v761 = vsel %vm760, %v758, %v755
      %v762 = vadd.f32 %v661, 1.0
      %v763 = vlog2.pop %v762
      %v764 = vmul.f32 %v763, 0.6931472
      %v765 = vmul.f32 -0.5, %v661
      %v766 = vadd.f32 %v765, 1.0
      %v767 = vmul.f32 %v766, %v661
      %v768 = vand.u32 2147483647, %v661
      %vm769 = vcmp.lt.f32.partialorder %v768, 0.0004427343
      %v770 = vsel %vm769, %v767, %v764
      %v771 = vadd.f32 %v663, 1.0
      %v772 = vlog2.pop %v771
      %v773 = vmul.f32 %v772, 0.6931472
      %v774 = vmul.f32 -0.5, %v663
      %v775 = vadd.f32 %v774, 1.0
      %v776 = vmul.f32 %v775, %v663
      %v777 = vand.u32 2147483647, %v663
      %vm778 = vcmp.lt.f32.partialorder %v777, 0.0004427343
      %v779 = vsel %vm778, %v776, %v773
      %v780 = vadd.f32 %v665, 1.0
      %v781 = vlog2.pop %v780
      %v782 = vmul.f32 %v781, 0.6931472
      %v783 = vmul.f32 -0.5, %v665
      %v784 = vadd.f32 %v783, 1.0
      %v785 = vmul.f32 %v784, %v665
      %v786 = vand.u32 2147483647, %v665
      %vm787 = vcmp.lt.f32.partialorder %v786, 0.0004427343
      %v788 = vsel %vm787, %v785, %v782
      %v789 = vadd.f32 %v667, 1.0
      %v790 = vlog2.pop %v789
      %v791 = vmul.f32 %v790, 0.6931472
      %v792 = vmul.f32 -0.5, %v667
      %v793 = vadd.f32 %v792, 1.0
      %v794 = vmul.f32 %v793, %v667
      %v795 = vand.u32 2147483647, %v667
      %vm796 = vcmp.lt.f32.partialorder %v795, 0.0004427343
      %v797 = vsel %vm796, %v794, %v791
      %v798 = vadd.f32 %v669, 1.0
      %v799 = vlog2.pop %v798
      %v800 = vmul.f32 %v799, 0.6931472
      %v801 = vmul.f32 -0.5, %v669
      %v802 = vadd.f32 %v801, 1.0
      %v803 = vmul.f32 %v802, %v669
      %v804 = vand.u32 2147483647, %v669
      %vm805 = vcmp.lt.f32.partialorder %v804, 0.0004427343
      %v806 = vsel %vm805, %v803, %v800
      %v807 = vadd.f32 %v671, 1.0
      %v808 = vlog2.pop %v807
      %v809 = vmul.f32 %v808, 0.6931472
      %v810 = vmul.f32 -0.5, %v671
      %v811 = vadd.f32 %v810, 1.0
      %v812 = vmul.f32 %v811, %v671
      %v813 = vand.u32 2147483647, %v671
      %vm814 = vcmp.lt.f32.partialorder %v813, 0.0004427343
      %v815 = vsel %vm814, %v812, %v809
      %v816 = vtanh.pop %v680
      %v817 = vtanh.pop %v689
      %v818 = vtanh.pop %v698
      %v819 = vtanh.pop %v707
      %v820 = vtanh.pop %v716
      %v821 = vtanh.pop %v725
      %v822 = vtanh.pop %v734
      %v823 = vtanh.pop %v743
      %v824 = vtanh.pop %v752
      %v825 = vtanh.pop %v761
      %v826 = vtanh.pop %v770
      %v827 = vtanh.pop %v779
      %v828 = vtanh.pop %v788
      %v829 = vtanh.pop %v797
      %v830 = vtanh.pop %v806
      %v831 = vtanh.pop %v815
      %v832 = vmul.f32 %v608, %v816
      %v833 = vmul.f32 %v609, %v817
      %v834 = vmul.f32 %v610, %v818
      %v835 = vmul.f32 %v611, %v819
      %v836 = vmul.f32 %v612, %v820
      %v837 = vmul.f32 %v613, %v821
      %v838 = vmul.f32 %v614, %v822
      %v839 = vmul.f32 %v615, %v823
      %v840 = vmul.f32 %v616, %v824
      %v841 = vmul.f32 %v617, %v825
      %v842 = vmul.f32 %v618, %v826
      %v843 = vmul.f32 %v619, %v827
      %v844 = vmul.f32 %v620, %v828
      %v845 = vmul.f32 %v621, %v829
      %v846 = vmul.f32 %v622, %v830
      %v847 = vmul.f32 %v623, %v831
      %v848 = vpack.c.bf16 %v833, %v832
      %v849 = vpack.c.bf16 %v835, %v834
      %v850 = vpack.c.bf16 %v837, %v836
      %v851 = vpack.c.bf16 %v839, %v838
      %v852 = vpack.c.bf16 %v841, %v840
      %v853 = vpack.c.bf16 %v843, %v842
      %v854 = vpack.c.bf16 %v845, %v844
      %v855 = vpack.c.bf16 %v847, %v846
      %v864 = vunpack.c.l.b16 %v848
      %v865 = vunpack.c.h.b16 %v848
      %v866 = vunpack.c.l.b16 %v849
      %v867 = vunpack.c.h.b16 %v849
      %v868 = vunpack.c.l.b16 %v850
      %v869 = vunpack.c.h.b16 %v850
      %v870 = vunpack.c.l.b16 %v851
      %v871 = vunpack.c.h.b16 %v851
      %v872 = vunpack.c.l.b16 %v852
      %v873 = vunpack.c.h.b16 %v852
      %v874 = vunpack.c.l.b16 %v853
      %v875 = vunpack.c.h.b16 %v853
      %v876 = vunpack.c.l.b16 %v854
      %v877 = vunpack.c.h.b16 %v854
      %v878 = vunpack.c.l.b16 %v855
      %v879 = vunpack.c.h.b16 %v855
      %v880 = vpack.c.b16 %v864, %v864
      %v881 = vpack.c.b16 %v865, %v865
      %v882 = vpack.c.b16 %v866, %v866
      %v883 = vpack.c.b16 %v867, %v867
      %v884 = vpack.c.b16 %v868, %v868
      %v885 = vpack.c.b16 %v869, %v869
      %v886 = vpack.c.b16 %v870, %v870
      %v887 = vpack.c.b16 %v871, %v871
      %v888 = vpack.c.b16 %v872, %v872
      %v889 = vpack.c.b16 %v873, %v873
      %v890 = vpack.c.b16 %v874, %v874
      %v891 = vpack.c.b16 %v875, %v875
      %v892 = vpack.c.b16 %v876, %v876
      %v893 = vpack.c.b16 %v877, %v877
      %v894 = vpack.c.b16 %v878, %v878
      %v895 = vpack.c.b16 %v879, %v879
      %912 = vst [vmem:[#allocation3] sm:$0xf] %v880
      %913 = vst [vmem:[#allocation3 + $0x4] sm:$0xf] %v881
      %914 = vst [vmem:[#allocation3 + $0x8] sm:$0xf] %v882
      %915 = vst [vmem:[#allocation3 + $0xc] sm:$0xf] %v883
      %916 = vst [vmem:[#allocation3 + $0x10] sm:$0xf] %v884
      %917 = vst [vmem:[#allocation3 + $0x14] sm:$0xf] %v885
      %918 = vst [vmem:[#allocation3 + $0x18] sm:$0xf] %v886
      %919 = vst [vmem:[#allocation3 + $0x1c] sm:$0xf] %v887
      %920 = vst [vmem:[#allocation3 + $0x20] sm:$0xf] %v888
      %921 = vst [vmem:[#allocation3 + $0x24] sm:$0xf] %v889
      %922 = vst [vmem:[#allocation3 + $0x28] sm:$0xf] %v890
      %923 = vst [vmem:[#allocation3 + $0x2c] sm:$0xf] %v891
      %924 = vst [vmem:[#allocation3 + $0x30] sm:$0xf] %v892
      %925 = vst [vmem:[#allocation3 + $0x34] sm:$0xf] %v893
      %926 = vst [vmem:[#allocation3 + $0x38] sm:$0xf] %v894
      %927 = vst [vmem:[#allocation3 + $0x3c] sm:$0xf] %v895
    $region33: #{csp_first_stage.11} parent=1 // pred_fallthru
      _
    // Predicated region
    $region34: #{csp_first_stage.11} parent=1 // pred_check
      _
    $region35: #{csp_first_stage.11} parent=1 // pred_check_branch
      %929 = sbr.rel (0) target = $region37
    $region36: #{csp_first_stage.11} parent=1 // pred_region
      %s931 = ssub.s32 1024, 1024
      %932 = vsyncadd [#allocation4], %s931
      %s933 = sshll.u32 [#allocation3], 4
      %s934 = int_to_ptr.vmem [resolvable:$true] %s933
      %939 = dma.vmem_to_hbm [thread:$0]  %s934, 1024, %s6, [#allocation4], 64, 64, 4
    $region37: #{csp_first_stage.11} parent=1 // pred_fallthru
      _
    // Predicated region
    $region38: #{csp_first_stage.11} parent=1 // pred_check
      _
    $region39: #{csp_first_stage.11} parent=1 // pred_check_branch
      %941 = sbr.rel (0) target = $region41
    $region40: #{csp_first_stage.11} parent=1 // pred_region
      %942 = dma.done [#allocation4], 1024
    $region41: #{csp_first_stage.11} parent=1 // pred_fallthru
      _
    %943 = vsyncpa [#allocation4], 1

</llo_original>
